<compile_context>
chip_gen: v7x
topology: tpu7x:2x2x1
jax: 0.10.0
libtpu: 0.0.40
codegen_flags: <defaults>
</compile_context>

<pallas_src>
import functools

import numpy as np

import jax
import jax.numpy as jnp
from jax.experimental import pallas as pl
from jax.experimental.pallas import tpu as pltpu


# ---------------------------------------------------------------------------
# In-kernel helpers (traced inside the fused Pallas kernel)
# ---------------------------------------------------------------------------
def _shift(a, d):
    """Cyclic shift along the flat spatial (lane) axis: out[:, f] = a[:, (f+d) % L].

    Wrap-around only corrupts grid-border positions, which are never consumed
    when producing valid (interior) outputs, so no masking is required.
    """
    l = a.shape[1]
    d = d % l
    if d == 0:
        return a
    return jnp.concatenate([a[:, d:], a[:, :d]], axis=1)


def _conv_relu(a, wmat, bias, wp):
    """3x3 / pad=1 conv + bias + ReLU on a padded-flat activation.

    a:    (Cin, L) with L = B*Hp*Wp, zero border, interior = activation.
    wmat: (Cout, 9*Cin), columns ordered (ky, kx, ci).
    bias: (Cout, 1).
    Returns (Cout, L); only interior columns are valid (border columns hold
    finite garbage that is never consumed downstream).
    """
    taps = []
    for ky in range(3):
        for kx in range(3):
            taps.append(_shift(a, (ky - 1) * wp + (kx - 1)))
    patches = jnp.concatenate(taps, axis=0)                    # in-kernel im2col (9*Cin, L)
    y = jnp.dot(wmat, patches, preferred_element_type=jnp.float32)
    return jnp.maximum(y + bias, 0.0)                          # lane-dense (Cout, L)


def _pool_regrid(y, g_ref, wp):
    """2x2 max-pool on the padded-flat grid + re-grid via a 0/1 gather matmul.

    y:     (C, L) conv output on the current padded grid (width Wp = wp).
    g_ref: (L, L_next) selection matrix; column g picks the pool-block anchor
           for interior position g of the NEXT zero-bordered padded grid
           (all-zero columns for the border -> border stays exactly 0).
    Returns (C, L_next).
    """
    m = jnp.maximum(y, _shift(y, 1))        # max over horizontal pairs
    m = jnp.maximum(m, _shift(m, wp))       # max over vertical pairs -> full 2x2 max at anchors
    # Single MXU GEMM: the K dim (<= 648) streams from VMEM through the MXU,
    # so accumulation stays on the systolic array (no manual K chunking).
    return jnp.dot(m, g_ref[...], preferred_element_type=jnp.float32)


# ---------------------------------------------------------------------------
# The single fused kernel
# ---------------------------------------------------------------------------
def _convnet_kernel(a0_ref, wm1_ref, bc1_ref, g1_ref,
                    wm2_ref, bc2_ref, g2_ref,
                    wm3_ref, bc3_ref, g3_ref,
                    wf1_ref, bf1_ref, wf2_ref, bf2_ref, wf3_ref, bf3_ref,
                    out_ref, *, wps, batch):
    wp1, wp2, wp3 = wps

    # conv1 + relu + pool1
    y1 = _conv_relu(a0_ref[...], wm1_ref[...], bc1_ref[...], wp1)   # (c1, B*18*18)
    a1 = _pool_regrid(y1, g1_ref, wp1)                              # (c1, B*10*10)
    # conv2 + relu + pool2
    y2 = _conv_relu(a1, wm2_ref[...], bc2_ref[...], wp2)            # (c2, B*10*10)
    a2 = _pool_regrid(y2, g2_ref, wp2)                              # (c2, B*6*6)
    # conv3 + relu + pool3 (final gather: columns ordered (q, b))
    y3 = _conv_relu(a2, wm3_ref[...], bc3_ref[...], wp3)            # (c3, B*6*6)
    s3 = _pool_regrid(y3, g3_ref, wp3)                              # (c3, npool*B)

    # Rearrange to (npool*c3, B); together with the host-side permutation of
    # the fc1 weight this realizes the PyTorch NCHW flatten with no runtime
    # activation transpose.
    npool = s3.shape[1] // batch
    rall = jnp.concatenate(
        [s3[:, q * batch:(q + 1) * batch] for q in range(npool)], axis=0)

    # Fused MLP (transposed: features x batch), fc1 -> relu -> fc2 -> relu -> fc3.
    f1 = jnp.maximum(
        jnp.dot(wf1_ref[...], rall, preferred_element_type=jnp.float32) + bf1_ref[...], 0.0)
    f2 = jnp.maximum(
        jnp.dot(wf2_ref[...], f1, preferred_element_type=jnp.float32) + bf2_ref[...], 0.0)
    f3 = jnp.dot(wf3_ref[...], f2, preferred_element_type=jnp.float32) + bf3_ref[...]

    out_ref[...] = f3.astype(out_ref.dtype)                         # (out_size, B)


# ---------------------------------------------------------------------------
# One-time host-side preparation (weight reordering + pooling gather matrices)
# ---------------------------------------------------------------------------
def _pool_regrid_matrix(batch, h):
    """Selection matrix: padded (h+2)^2 grid -> pooled h/2 map placed in the
    interior of a zero-bordered (h/2+2)^2 grid (flat, per batch)."""
    hp, ho = h + 2, h // 2
    hop = ho + 2
    l_in, l_out = batch * hp * hp, batch * hop * hop
    g = np.arange(l_out)
    gb, gr = g // (hop * hop), g % (hop * hop)
    gy, gx = gr // hop, gr % hop
    interior = (gy >= 1) & (gy <= ho) & (gx >= 1) & (gx <= ho)
    anchor = gb * hp * hp + (2 * gy - 1) * hp + (2 * gx - 1)
    f = np.arange(l_in)[:, None]
    mat = ((f == anchor[None, :]) & interior[None, :]).astype(np.float32)
    return jnp.asarray(mat)


def _final_pool_matrix(batch, h):
    """Selection matrix for the last pool: columns ordered (q, b) with
    q = yo*(h//2)+xo row-major over the pooled map."""
    hp, ho = h + 2, h // 2
    l_in = batch * hp * hp
    c = np.arange(ho * ho * batch)
    q, b = c // batch, c % batch
    yo, xo = q // ho, q % ho
    anchor = b * hp * hp + (2 * yo + 1) * hp + (2 * xo + 1)
    f = np.arange(l_in)[:, None]
    return jnp.asarray((f == anchor[None, :]).astype(np.float32))


def prepare_inputs(params, *, batch, patch_size):
    """One-time prep: conv weights -> (Cout, 9*Cin) tap-ordered GEMM form,
    fc1 weight column-permuted to absorb the NCHW flatten, biases as columns,
    and the pooling gather matrices."""
    def conv_mat(w):  # (Cout, Cin, 3, 3) -> (Cout, 9*Cin), columns (ky, kx, ci)
        co, ci, kh, kw = w.shape
        return jnp.transpose(w, (0, 2, 3, 1)).reshape(co, kh * kw * ci)

    def col(b):
        return b.reshape(-1, 1)

    c3 = params["conv3_w"].shape[0]
    h1, h2, h3 = patch_size, patch_size // 2, patch_size // 4
    npool = (h3 // 2) ** 2
    l1_out = params["fc1_w"].shape[0]
    # wf1[j, q*c3 + co] = fc1_w[j, co*npool + q]
    wf1 = jnp.transpose(params["fc1_w"].reshape(l1_out, c3, npool),
                        (0, 2, 1)).reshape(l1_out, npool * c3)

    return {
        "wm1": conv_mat(params["conv1_w"]), "bc1": col(params["conv1_b"]),
        "g1": _pool_regrid_matrix(batch, h1),
        "wm2": conv_mat(params["conv2_w"]), "bc2": col(params["conv2_b"]),
        "g2": _pool_regrid_matrix(batch, h2),
        "wm3": conv_mat(params["conv3_w"]), "bc3": col(params["conv3_b"]),
        "g3": _final_pool_matrix(batch, h3),
        "wf1": wf1, "bf1": col(params["fc1_b"]),
        "wf2": params["fc2_w"], "bf2": col(params["fc2_b"]),
        "wf3": params["fc3_w"], "bf3": col(params["fc3_b"]),
    }


# ---------------------------------------------------------------------------
# Public forward: one pallas_call (+ tiny edge glue for the raw input / output)
# ---------------------------------------------------------------------------
def _full_spec(shape):
    nd = len(shape)
    return pl.BlockSpec(shape, lambda i, _nd=nd: (0,) * _nd)


def convnet_forward(x_nchw, prep):
    b, cin, h, w = x_nchw.shape
    assert cin == 1 and h == w and h % 8 == 0
    wps = (h + 2, h // 2 + 2, h // 4 + 2)
    out_features = prep["wf3"].shape[0]

    # Edge glue: zero-pad the raw input and flatten to the padded-flat layout
    # (Cin, B*Hp*Wp).  This is the only XLA op on the activation path.
    xp = jnp.pad(x_nchw, ((0, 0), (0, 0), (1, 1), (1, 1)))
    a0 = jnp.transpose(xp, (1, 0, 2, 3)).reshape(cin, b * wps[0] * wps[0])

    args = (a0,
            prep["wm1"], prep["bc1"], prep["g1"],
            prep["wm2"], prep["bc2"], prep["g2"],
            prep["wm3"], prep["bc3"], prep["g3"],
            prep["wf1"], prep["bf1"], prep["wf2"], prep["bf2"],
            prep["wf3"], prep["bf3"])

    out = pl.pallas_call(
        functools.partial(_convnet_kernel, wps=wps, batch=b),
        out_shape=jax.ShapeDtypeStruct((out_features, b), jnp.float32),
        grid=(1,),
        in_specs=[_full_spec(a.shape) for a in args],
        out_specs=_full_spec((out_features, b)),
        compiler_params=pltpu.CompilerParams(dimension_semantics=("arbitrary",)),
    )(*args)
    # Final (out_size, B) -> (B, out_size): 80-byte edge transpose outside the kernel.
    return out.T


# ---------------------------------------------------------------------------
# Pure-JAX reference (mirrors the PyTorch module) for an in-script self-check
# ---------------------------------------------------------------------------
def reference_forward(x, params):
    hp = jax.lax.Precision.HIGHEST

    def conv_relu(h, wt, bs):
        y = jax.lax.conv_general_dilated(
            h, wt, window_strides=(1, 1), padding=((1, 1), (1, 1)),
            dimension_numbers=("NCHW", "OIHW", "NCHW"), precision=hp)
        return jnp.maximum(y + bs[None, :, None, None], 0.0)

    def pool(h):
        n, c, hh, ww = h.shape
        return h.reshape(n, c, hh // 2, 2, ww // 2, 2).max(axis=(3, 5))

    h = pool(conv_relu(x, params["conv1_w"], params["conv1_b"]))
    h = pool(conv_relu(h, params["conv2_w"], params["conv2_b"]))
    h = pool(conv_relu(h, params["conv3_w"], params["conv3_b"]))
    flat = h.reshape(h.shape[0], -1)                          # NCHW flatten
    f1 = jnp.maximum(jnp.dot(flat, params["fc1_w"].T, precision=hp) + params["fc1_b"], 0.0)
    f2 = jnp.maximum(jnp.dot(f1, params["fc2_w"].T, precision=hp) + params["fc2_b"], 0.0)
    return jnp.dot(f2, params["fc3_w"].T, precision=hp) + params["fc3_b"]


# ---------------------------------------------------------------------------
# Main
# ---------------------------------------------------------------------------
if __name__ == "__main__":
    # Module hyperparameters (small, consistent with the PyTorch __init__).
    c1_out, c2_out, c3_out = 4, 8, 16
    l1_out, l2_out, out_size = 32, 16, 10
    kernel_size, patch_size, pool_size, pad = 3, 16, 2, 1
    batch = 2
    convout_size = int(c3_out * (patch_size / pool_size ** 3) ** 2)  # = 64

    key = jax.random.PRNGKey(0)
    keys = jax.random.split(key, 13)

    def init(k, shape, scale=0.1):
        return (scale * jax.random.normal(k, shape)).astype(jnp.float32)

    # Parameters stored in PyTorch layout: conv (Cout, Cin, KH, KW), fc (out, in).
    params = {
        "conv1_w": init(keys[0], (c1_out, 1, kernel_size, kernel_size)),
        "conv1_b": init(keys[1], (c1_out,)),
        "conv2_w": init(keys[2], (c2_out, c1_out, kernel_size, kernel_size)),
        "conv2_b": init(keys[3], (c2_out,)),
        "conv3_w": init(keys[4], (c3_out, c2_out, kernel_size, kernel_size)),
        "conv3_b": init(keys[5], (c3_out,)),
        "fc1_w": init(keys[6], (l1_out, convout_size)),
        "fc1_b": init(keys[7], (l1_out,)),
        "fc2_w": init(keys[8], (l2_out, l1_out)),
        "fc2_b": init(keys[9], (l2_out,)),
        "fc3_w": init(keys[10], (out_size, l2_out)),
        "fc3_b": init(keys[11], (out_size,)),
    }

    # PyTorch-style NCHW input: (batch, 1, patch_size, patch_size).
    x = jax.random.normal(keys[12], (batch, 1, patch_size, patch_size),
                          dtype=jnp.float32)

    # One-time host-side prep, then a single fused Pallas kernel per forward.
    prep = prepare_inputs(params, batch=batch, patch_size=patch_size)
    fwd = jax.jit(convnet_forward)

    out = jax.block_until_ready(fwd(x, prep))
    assert out.shape == (batch, out_size)
    assert bool(jnp.all(jnp.isfinite(out)))

    # Numerical self-check against the pure-JAX reference of the PyTorch module.
    ref = reference_forward(x, params)
    max_err = float(jnp.max(jnp.abs(out - ref)))
    assert max_err < 1e-3, f"mismatch vs reference: max abs err = {max_err}"

    print("KERNEL_OK")
</pallas_src>

<mosaic_0001>
module attributes {stable_mosaic.version = 11 : i64} {
  func.func @_convnet_kernel(%arg0: i32, %arg1: memref<1x648xf32, #tpu.memory_space<vmem>>, %arg2: memref<4x9xf32, #tpu.memory_space<vmem>>, %arg3: memref<4x1xf32, #tpu.memory_space<vmem>>, %arg4: memref<648x200xf32, #tpu.memory_space<vmem>>, %arg5: memref<8x36xf32, #tpu.memory_space<vmem>>, %arg6: memref<8x1xf32, #tpu.memory_space<vmem>>, %arg7: memref<200x72xf32, #tpu.memory_space<vmem>>, %arg8: memref<16x72xf32, #tpu.memory_space<vmem>>, %arg9: memref<16x1xf32, #tpu.memory_space<vmem>>, %arg10: memref<72x8xf32, #tpu.memory_space<vmem>>, %arg11: memref<32x64xf32, #tpu.memory_space<vmem>>, %arg12: memref<32x1xf32, #tpu.memory_space<vmem>>, %arg13: memref<16x32xf32, #tpu.memory_space<vmem>>, %arg14: memref<16x1xf32, #tpu.memory_space<vmem>>, %arg15: memref<10x16xf32, #tpu.memory_space<vmem>>, %arg16: memref<10x1xf32, #tpu.memory_space<vmem>>, %arg17: memref<10x2xf32, #tpu.memory_space<vmem>>) attributes {dimension_semantics = [#tpu.dimension_semantics<arbitrary>], iteration_bounds = array<i64: 1>, scalar_prefetch = 0 : i64, scratch_operands = 0 : i64, tpu.core_type = #tpu.core_type<tc>, window_params = [{pipeline_mode = #tpu.pipeline_mode<synchronous>, transform_indices = @transform_0, window_bounds = array<i64: 1, 648>}, {pipeline_mode = #tpu.pipeline_mode<synchronous>, transform_indices = @transform_1, window_bounds = array<i64: 4, 9>}, {pipeline_mode = #tpu.pipeline_mode<synchronous>, transform_indices = @transform_2, window_bounds = array<i64: 4, 1>}, {pipeline_mode = #tpu.pipeline_mode<synchronous>, transform_indices = @transform_3, window_bounds = array<i64: 648, 200>}, {pipeline_mode = #tpu.pipeline_mode<synchronous>, transform_indices = @transform_4, window_bounds = array<i64: 8, 36>}, {pipeline_mode = #tpu.pipeline_mode<synchronous>, transform_indices = @transform_5, window_bounds = array<i64: 8, 1>}, {pipeline_mode = #tpu.pipeline_mode<synchronous>, transform_indices = @transform_6, window_bounds = array<i64: 200, 72>}, {pipeline_mode = #tpu.pipeline_mode<synchronous>, transform_indices = @transform_7, window_bounds = array<i64: 16, 72>}, {pipeline_mode = #tpu.pipeline_mode<synchronous>, transform_indices = @transform_8, window_bounds = array<i64: 16, 1>}, {pipeline_mode = #tpu.pipeline_mode<synchronous>, transform_indices = @transform_9, window_bounds = array<i64: 72, 8>}, {pipeline_mode = #tpu.pipeline_mode<synchronous>, transform_indices = @transform_10, window_bounds = array<i64: 32, 64>}, {pipeline_mode = #tpu.pipeline_mode<synchronous>, transform_indices = @transform_11, window_bounds = array<i64: 32, 1>}, {pipeline_mode = #tpu.pipeline_mode<synchronous>, transform_indices = @transform_12, window_bounds = array<i64: 16, 32>}, {pipeline_mode = #tpu.pipeline_mode<synchronous>, transform_indices = @transform_13, window_bounds = array<i64: 16, 1>}, {pipeline_mode = #tpu.pipeline_mode<synchronous>, transform_indices = @transform_14, window_bounds = array<i64: 10, 16>}, {pipeline_mode = #tpu.pipeline_mode<synchronous>, transform_indices = @transform_15, window_bounds = array<i64: 10, 1>}, {pipeline_mode = #tpu.pipeline_mode<synchronous>, transform_indices = @transform_16, window_bounds = array<i64: 10, 2>}]} {
    %c0 = arith.constant 0 : index
    %c0_0 = arith.constant 0 : index
    %0 = vector.load %arg1[%c0, %c0_0] : memref<1x648xf32, #tpu.memory_space<vmem>>, vector<1x648xf32>
    %c0_1 = arith.constant 0 : index
    %c0_2 = arith.constant 0 : index
    %1 = vector.load %arg2[%c0_1, %c0_2] : memref<4x9xf32, #tpu.memory_space<vmem>>, vector<4x9xf32>
    %c0_3 = arith.constant 0 : index
    %c0_4 = arith.constant 0 : index
    %2 = vector.load %arg3[%c0_3, %c0_4] : memref<4x1xf32, #tpu.memory_space<vmem>>, vector<4x1xf32>
    %3 = vector.extract_strided_slice %0 {offsets = [0, 629], sizes = [1, 19], strides = [1, 1]} : vector<1x648xf32> to vector<1x19xf32>
    %4 = vector.extract_strided_slice %0 {offsets = [0, 0], sizes = [1, 629], strides = [1, 1]} : vector<1x648xf32> to vector<1x629xf32>
    %5 = tpu.concatenate %3, %4 in 1 : vector<1x19xf32>, vector<1x629xf32> -> vector<1x648xf32>
    %6 = vector.extract_strided_slice %0 {offsets = [0, 630], sizes = [1, 18], strides = [1, 1]} : vector<1x648xf32> to vector<1x18xf32>
    %7 = vector.extract_strided_slice %0 {offsets = [0, 0], sizes = [1, 630], strides = [1, 1]} : vector<1x648xf32> to vector<1x630xf32>
    %8 = tpu.concatenate %6, %7 in 1 : vector<1x18xf32>, vector<1x630xf32> -> vector<1x648xf32>
    %9 = vector.extract_strided_slice %0 {offsets = [0, 631], sizes = [1, 17], strides = [1, 1]} : vector<1x648xf32> to vector<1x17xf32>
    %10 = vector.extract_strided_slice %0 {offsets = [0, 0], sizes = [1, 631], strides = [1, 1]} : vector<1x648xf32> to vector<1x631xf32>
    %11 = tpu.concatenate %9, %10 in 1 : vector<1x17xf32>, vector<1x631xf32> -> vector<1x648xf32>
    %12 = vector.extract_strided_slice %0 {offsets = [0, 647], sizes = [1, 1], strides = [1, 1]} : vector<1x648xf32> to vector<1x1xf32>
    %13 = vector.extract_strided_slice %0 {offsets = [0, 0], sizes = [1, 647], strides = [1, 1]} : vector<1x648xf32> to vector<1x647xf32>
    %14 = tpu.concatenate %12, %13 in 1 : vector<1x1xf32>, vector<1x647xf32> -> vector<1x648xf32>
    %15 = vector.extract_strided_slice %0 {offsets = [0, 1], sizes = [1, 647], strides = [1, 1]} : vector<1x648xf32> to vector<1x647xf32>
    %16 = vector.extract_strided_slice %0 {offsets = [0, 0], sizes = [1, 1], strides = [1, 1]} : vector<1x648xf32> to vector<1x1xf32>
    %17 = tpu.concatenate %15, %16 in 1 : vector<1x647xf32>, vector<1x1xf32> -> vector<1x648xf32>
    %18 = vector.extract_strided_slice %0 {offsets = [0, 17], sizes = [1, 631], strides = [1, 1]} : vector<1x648xf32> to vector<1x631xf32>
    %19 = vector.extract_strided_slice %0 {offsets = [0, 0], sizes = [1, 17], strides = [1, 1]} : vector<1x648xf32> to vector<1x17xf32>
    %20 = tpu.concatenate %18, %19 in 1 : vector<1x631xf32>, vector<1x17xf32> -> vector<1x648xf32>
    %21 = vector.extract_strided_slice %0 {offsets = [0, 18], sizes = [1, 630], strides = [1, 1]} : vector<1x648xf32> to vector<1x630xf32>
    %22 = vector.extract_strided_slice %0 {offsets = [0, 0], sizes = [1, 18], strides = [1, 1]} : vector<1x648xf32> to vector<1x18xf32>
    %23 = tpu.concatenate %21, %22 in 1 : vector<1x630xf32>, vector<1x18xf32> -> vector<1x648xf32>
    %24 = vector.extract_strided_slice %0 {offsets = [0, 19], sizes = [1, 629], strides = [1, 1]} : vector<1x648xf32> to vector<1x629xf32>
    %25 = vector.extract_strided_slice %0 {offsets = [0, 0], sizes = [1, 19], strides = [1, 1]} : vector<1x648xf32> to vector<1x19xf32>
    %26 = tpu.concatenate %24, %25 in 1 : vector<1x629xf32>, vector<1x19xf32> -> vector<1x648xf32>
    %27 = tpu.concatenate %5, %8, %11, %14, %0, %17, %20, %23, %26 in 0 : vector<1x648xf32>, vector<1x648xf32>, vector<1x648xf32>, vector<1x648xf32>, vector<1x648xf32>, vector<1x648xf32>, vector<1x648xf32>, vector<1x648xf32>, vector<1x648xf32> -> vector<9x648xf32>
    %cst = arith.constant dense<0.000000e+00> : vector<4x648xf32>
    %28 = tpu.matmul %1, %27, %cst {dimension_numbers = #tpu.dot_dimension_numbers<[1], [0], [0], [1], [0, 0, 1, 1], [], []>} : vector<4x9xf32>, vector<9x648xf32>, vector<4x648xf32> -> vector<4x648xf32>
    %29 = vector.broadcast %2 : vector<4x1xf32> to vector<4x648xf32>
    %30 = arith.addf %28, %29 : vector<4x648xf32>
    %cst_5 = arith.constant 0.000000e+00 : f32
    %31 = vector.broadcast %cst_5 : f32 to vector<4x648xf32>
    %32 = arith.maximumf %30, %31 : vector<4x648xf32>
    %33 = vector.extract_strided_slice %32 {offsets = [0, 1], sizes = [4, 647], strides = [1, 1]} : vector<4x648xf32> to vector<4x647xf32>
    %34 = vector.extract_strided_slice %32 {offsets = [0, 0], sizes = [4, 1], strides = [1, 1]} : vector<4x648xf32> to vector<4x1xf32>
    %35 = tpu.concatenate %33, %34 in 1 : vector<4x647xf32>, vector<4x1xf32> -> vector<4x648xf32>
    %36 = arith.maximumf %32, %35 : vector<4x648xf32>
    %37 = vector.extract_strided_slice %36 {offsets = [0, 18], sizes = [4, 630], strides = [1, 1]} : vector<4x648xf32> to vector<4x630xf32>
    %38 = vector.extract_strided_slice %36 {offsets = [0, 0], sizes = [4, 18], strides = [1, 1]} : vector<4x648xf32> to vector<4x18xf32>
    %39 = tpu.concatenate %37, %38 in 1 : vector<4x630xf32>, vector<4x18xf32> -> vector<4x648xf32>
    %40 = arith.maximumf %36, %39 : vector<4x648xf32>
    %c0_6 = arith.constant 0 : index
    %c0_7 = arith.constant 0 : index
    %41 = vector.load %arg4[%c0_6, %c0_7] : memref<648x200xf32, #tpu.memory_space<vmem>>, vector<648x200xf32>
    %cst_8 = arith.constant dense<0.000000e+00> : vector<4x200xf32>
    %42 = tpu.matmul %40, %41, %cst_8 {dimension_numbers = #tpu.dot_dimension_numbers<[1], [0], [0], [1], [0, 0, 1, 1], [], []>} : vector<4x648xf32>, vector<648x200xf32>, vector<4x200xf32> -> vector<4x200xf32>
    %c0_9 = arith.constant 0 : index
    %c0_10 = arith.constant 0 : index
    %43 = vector.load %arg5[%c0_9, %c0_10] : memref<8x36xf32, #tpu.memory_space<vmem>>, vector<8x36xf32>
    %c0_11 = arith.constant 0 : index
    %c0_12 = arith.constant 0 : index
    %44 = vector.load %arg6[%c0_11, %c0_12] : memref<8x1xf32, #tpu.memory_space<vmem>>, vector<8x1xf32>
    %45 = vector.extract_strided_slice %42 {offsets = [0, 189], sizes = [4, 11], strides = [1, 1]} : vector<4x200xf32> to vector<4x11xf32>
    %46 = vector.extract_strided_slice %42 {offsets = [0, 0], sizes = [4, 189], strides = [1, 1]} : vector<4x200xf32> to vector<4x189xf32>
    %47 = tpu.concatenate %45, %46 in 1 : vector<4x11xf32>, vector<4x189xf32> -> vector<4x200xf32>
    %48 = vector.extract_strided_slice %42 {offsets = [0, 190], sizes = [4, 10], strides = [1, 1]} : vector<4x200xf32> to vector<4x10xf32>
    %49 = vector.extract_strided_slice %42 {offsets = [0, 0], sizes = [4, 190], strides = [1, 1]} : vector<4x200xf32> to vector<4x190xf32>
    %50 = tpu.concatenate %48, %49 in 1 : vector<4x10xf32>, vector<4x190xf32> -> vector<4x200xf32>
    %51 = vector.extract_strided_slice %42 {offsets = [0, 191], sizes = [4, 9], strides = [1, 1]} : vector<4x200xf32> to vector<4x9xf32>
    %52 = vector.extract_strided_slice %42 {offsets = [0, 0], sizes = [4, 191], strides = [1, 1]} : vector<4x200xf32> to vector<4x191xf32>
    %53 = tpu.concatenate %51, %52 in 1 : vector<4x9xf32>, vector<4x191xf32> -> vector<4x200xf32>
    %54 = vector.extract_strided_slice %42 {offsets = [0, 199], sizes = [4, 1], strides = [1, 1]} : vector<4x200xf32> to vector<4x1xf32>
    %55 = vector.extract_strided_slice %42 {offsets = [0, 0], sizes = [4, 199], strides = [1, 1]} : vector<4x200xf32> to vector<4x199xf32>
    %56 = tpu.concatenate %54, %55 in 1 : vector<4x1xf32>, vector<4x199xf32> -> vector<4x200xf32>
    %57 = vector.extract_strided_slice %42 {offsets = [0, 1], sizes = [4, 199], strides = [1, 1]} : vector<4x200xf32> to vector<4x199xf32>
    %58 = vector.extract_strided_slice %42 {offsets = [0, 0], sizes = [4, 1], strides = [1, 1]} : vector<4x200xf32> to vector<4x1xf32>
    %59 = tpu.concatenate %57, %58 in 1 : vector<4x199xf32>, vector<4x1xf32> -> vector<4x200xf32>
    %60 = vector.extract_strided_slice %42 {offsets = [0, 9], sizes = [4, 191], strides = [1, 1]} : vector<4x200xf32> to vector<4x191xf32>
    %61 = vector.extract_strided_slice %42 {offsets = [0, 0], sizes = [4, 9], strides = [1, 1]} : vector<4x200xf32> to vector<4x9xf32>
    %62 = tpu.concatenate %60, %61 in 1 : vector<4x191xf32>, vector<4x9xf32> -> vector<4x200xf32>
    %63 = vector.extract_strided_slice %42 {offsets = [0, 10], sizes = [4, 190], strides = [1, 1]} : vector<4x200xf32> to vector<4x190xf32>
    %64 = vector.extract_strided_slice %42 {offsets = [0, 0], sizes = [4, 10], strides = [1, 1]} : vector<4x200xf32> to vector<4x10xf32>
    %65 = tpu.concatenate %63, %64 in 1 : vector<4x190xf32>, vector<4x10xf32> -> vector<4x200xf32>
    %66 = vector.extract_strided_slice %42 {offsets = [0, 11], sizes = [4, 189], strides = [1, 1]} : vector<4x200xf32> to vector<4x189xf32>
    %67 = vector.extract_strided_slice %42 {offsets = [0, 0], sizes = [4, 11], strides = [1, 1]} : vector<4x200xf32> to vector<4x11xf32>
    %68 = tpu.concatenate %66, %67 in 1 : vector<4x189xf32>, vector<4x11xf32> -> vector<4x200xf32>
    %69 = tpu.concatenate %47, %50, %53, %56, %42, %59, %62, %65, %68 in 0 : vector<4x200xf32>, vector<4x200xf32>, vector<4x200xf32>, vector<4x200xf32>, vector<4x200xf32>, vector<4x200xf32>, vector<4x200xf32>, vector<4x200xf32>, vector<4x200xf32> -> vector<36x200xf32>
    %cst_13 = arith.constant dense<0.000000e+00> : vector<8x200xf32>
    %70 = tpu.matmul %43, %69, %cst_13 {dimension_numbers = #tpu.dot_dimension_numbers<[1], [0], [0], [1], [0, 0, 1, 1], [], []>} : vector<8x36xf32>, vector<36x200xf32>, vector<8x200xf32> -> vector<8x200xf32>
    %71 = vector.broadcast %44 : vector<8x1xf32> to vector<8x200xf32>
    %72 = arith.addf %70, %71 : vector<8x200xf32>
    %cst_14 = arith.constant 0.000000e+00 : f32
    %73 = vector.broadcast %cst_14 : f32 to vector<8x200xf32>
    %74 = arith.maximumf %72, %73 : vector<8x200xf32>
    %75 = vector.extract_strided_slice %74 {offsets = [0, 1], sizes = [8, 199], strides = [1, 1]} : vector<8x200xf32> to vector<8x199xf32>
    %76 = vector.extract_strided_slice %74 {offsets = [0, 0], sizes = [8, 1], strides = [1, 1]} : vector<8x200xf32> to vector<8x1xf32>
    %77 = tpu.concatenate %75, %76 in 1 : vector<8x199xf32>, vector<8x1xf32> -> vector<8x200xf32>
    %78 = arith.maximumf %74, %77 : vector<8x200xf32>
    %79 = vector.extract_strided_slice %78 {offsets = [0, 10], sizes = [8, 190], strides = [1, 1]} : vector<8x200xf32> to vector<8x190xf32>
    %80 = vector.extract_strided_slice %78 {offsets = [0, 0], sizes = [8, 10], strides = [1, 1]} : vector<8x200xf32> to vector<8x10xf32>
    %81 = tpu.concatenate %79, %80 in 1 : vector<8x190xf32>, vector<8x10xf32> -> vector<8x200xf32>
    %82 = arith.maximumf %78, %81 : vector<8x200xf32>
    %c0_15 = arith.constant 0 : index
    %c0_16 = arith.constant 0 : index
    %83 = vector.load %arg7[%c0_15, %c0_16] : memref<200x72xf32, #tpu.memory_space<vmem>>, vector<200x72xf32>
    %cst_17 = arith.constant dense<0.000000e+00> : vector<8x72xf32>
    %84 = tpu.matmul %82, %83, %cst_17 {dimension_numbers = #tpu.dot_dimension_numbers<[1], [0], [0], [1], [0, 0, 1, 1], [], []>} : vector<8x200xf32>, vector<200x72xf32>, vector<8x72xf32> -> vector<8x72xf32>
    %c0_18 = arith.constant 0 : index
    %c0_19 = arith.constant 0 : index
    %85 = vector.load %arg8[%c0_18, %c0_19] : memref<16x72xf32, #tpu.memory_space<vmem>>, vector<16x72xf32>
    %c0_20 = arith.constant 0 : index
    %c0_21 = arith.constant 0 : index
    %86 = vector.load %arg9[%c0_20, %c0_21] : memref<16x1xf32, #tpu.memory_space<vmem>>, vector<16x1xf32>
    %87 = vector.extract_strided_slice %84 {offsets = [0, 65], sizes = [8, 7], strides = [1, 1]} : vector<8x72xf32> to vector<8x7xf32>
    %88 = vector.extract_strided_slice %84 {offsets = [0, 0], sizes = [8, 65], strides = [1, 1]} : vector<8x72xf32> to vector<8x65xf32>
    %89 = tpu.concatenate %87, %88 in 1 : vector<8x7xf32>, vector<8x65xf32> -> vector<8x72xf32>
    %90 = vector.extract_strided_slice %84 {offsets = [0, 66], sizes = [8, 6], strides = [1, 1]} : vector<8x72xf32> to vector<8x6xf32>
    %91 = vector.extract_strided_slice %84 {offsets = [0, 0], sizes = [8, 66], strides = [1, 1]} : vector<8x72xf32> to vector<8x66xf32>
    %92 = tpu.concatenate %90, %91 in 1 : vector<8x6xf32>, vector<8x66xf32> -> vector<8x72xf32>
    %93 = vector.extract_strided_slice %84 {offsets = [0, 67], sizes = [8, 5], strides = [1, 1]} : vector<8x72xf32> to vector<8x5xf32>
    %94 = vector.extract_strided_slice %84 {offsets = [0, 0], sizes = [8, 67], strides = [1, 1]} : vector<8x72xf32> to vector<8x67xf32>
    %95 = tpu.concatenate %93, %94 in 1 : vector<8x5xf32>, vector<8x67xf32> -> vector<8x72xf32>
    %96 = vector.extract_strided_slice %84 {offsets = [0, 71], sizes = [8, 1], strides = [1, 1]} : vector<8x72xf32> to vector<8x1xf32>
    %97 = vector.extract_strided_slice %84 {offsets = [0, 0], sizes = [8, 71], strides = [1, 1]} : vector<8x72xf32> to vector<8x71xf32>
    %98 = tpu.concatenate %96, %97 in 1 : vector<8x1xf32>, vector<8x71xf32> -> vector<8x72xf32>
    %99 = vector.extract_strided_slice %84 {offsets = [0, 1], sizes = [8, 71], strides = [1, 1]} : vector<8x72xf32> to vector<8x71xf32>
    %100 = vector.extract_strided_slice %84 {offsets = [0, 0], sizes = [8, 1], strides = [1, 1]} : vector<8x72xf32> to vector<8x1xf32>
    %101 = tpu.concatenate %99, %100 in 1 : vector<8x71xf32>, vector<8x1xf32> -> vector<8x72xf32>
    %102 = vector.extract_strided_slice %84 {offsets = [0, 5], sizes = [8, 67], strides = [1, 1]} : vector<8x72xf32> to vector<8x67xf32>
    %103 = vector.extract_strided_slice %84 {offsets = [0, 0], sizes = [8, 5], strides = [1, 1]} : vector<8x72xf32> to vector<8x5xf32>
    %104 = tpu.concatenate %102, %103 in 1 : vector<8x67xf32>, vector<8x5xf32> -> vector<8x72xf32>
    %105 = vector.extract_strided_slice %84 {offsets = [0, 6], sizes = [8, 66], strides = [1, 1]} : vector<8x72xf32> to vector<8x66xf32>
    %106 = vector.extract_strided_slice %84 {offsets = [0, 0], sizes = [8, 6], strides = [1, 1]} : vector<8x72xf32> to vector<8x6xf32>
    %107 = tpu.concatenate %105, %106 in 1 : vector<8x66xf32>, vector<8x6xf32> -> vector<8x72xf32>
    %108 = vector.extract_strided_slice %84 {offsets = [0, 7], sizes = [8, 65], strides = [1, 1]} : vector<8x72xf32> to vector<8x65xf32>
    %109 = vector.extract_strided_slice %84 {offsets = [0, 0], sizes = [8, 7], strides = [1, 1]} : vector<8x72xf32> to vector<8x7xf32>
    %110 = tpu.concatenate %108, %109 in 1 : vector<8x65xf32>, vector<8x7xf32> -> vector<8x72xf32>
    %111 = tpu.concatenate %89, %92, %95, %98, %84, %101, %104, %107, %110 in 0 : vector<8x72xf32>, vector<8x72xf32>, vector<8x72xf32>, vector<8x72xf32>, vector<8x72xf32>, vector<8x72xf32>, vector<8x72xf32>, vector<8x72xf32>, vector<8x72xf32> -> vector<72x72xf32>
    %cst_22 = arith.constant dense<0.000000e+00> : vector<16x72xf32>
    %112 = tpu.matmul %85, %111, %cst_22 {dimension_numbers = #tpu.dot_dimension_numbers<[1], [0], [0], [1], [0, 0, 1, 1], [], []>} : vector<16x72xf32>, vector<72x72xf32>, vector<16x72xf32> -> vector<16x72xf32>
    %113 = vector.broadcast %86 : vector<16x1xf32> to vector<16x72xf32>
    %114 = arith.addf %112, %113 : vector<16x72xf32>
    %cst_23 = arith.constant 0.000000e+00 : f32
    %115 = vector.broadcast %cst_23 : f32 to vector<16x72xf32>
    %116 = arith.maximumf %114, %115 : vector<16x72xf32>
    %117 = vector.extract_strided_slice %116 {offsets = [0, 1], sizes = [16, 71], strides = [1, 1]} : vector<16x72xf32> to vector<16x71xf32>
    %118 = vector.extract_strided_slice %116 {offsets = [0, 0], sizes = [16, 1], strides = [1, 1]} : vector<16x72xf32> to vector<16x1xf32>
    %119 = tpu.concatenate %117, %118 in 1 : vector<16x71xf32>, vector<16x1xf32> -> vector<16x72xf32>
    %120 = arith.maximumf %116, %119 : vector<16x72xf32>
    %121 = vector.extract_strided_slice %120 {offsets = [0, 6], sizes = [16, 66], strides = [1, 1]} : vector<16x72xf32> to vector<16x66xf32>
    %122 = vector.extract_strided_slice %120 {offsets = [0, 0], sizes = [16, 6], strides = [1, 1]} : vector<16x72xf32> to vector<16x6xf32>
    %123 = tpu.concatenate %121, %122 in 1 : vector<16x66xf32>, vector<16x6xf32> -> vector<16x72xf32>
    %124 = arith.maximumf %120, %123 : vector<16x72xf32>
    %c0_24 = arith.constant 0 : index
    %c0_25 = arith.constant 0 : index
    %125 = vector.load %arg10[%c0_24, %c0_25] : memref<72x8xf32, #tpu.memory_space<vmem>>, vector<72x8xf32>
    %cst_26 = arith.constant dense<0.000000e+00> : vector<16x8xf32>
    %126 = tpu.matmul %124, %125, %cst_26 {dimension_numbers = #tpu.dot_dimension_numbers<[1], [0], [0], [1], [0, 0, 1, 1], [], []>} : vector<16x72xf32>, vector<72x8xf32>, vector<16x8xf32> -> vector<16x8xf32>
    %127 = vector.extract_strided_slice %126 {offsets = [0, 0], sizes = [16, 2], strides = [1, 1]} : vector<16x8xf32> to vector<16x2xf32>
    %128 = vector.extract_strided_slice %126 {offsets = [0, 2], sizes = [16, 2], strides = [1, 1]} : vector<16x8xf32> to vector<16x2xf32>
    %129 = vector.extract_strided_slice %126 {offsets = [0, 4], sizes = [16, 2], strides = [1, 1]} : vector<16x8xf32> to vector<16x2xf32>
    %130 = vector.extract_strided_slice %126 {offsets = [0, 6], sizes = [16, 2], strides = [1, 1]} : vector<16x8xf32> to vector<16x2xf32>
    %131 = tpu.concatenate %127, %128, %129, %130 in 0 : vector<16x2xf32>, vector<16x2xf32>, vector<16x2xf32>, vector<16x2xf32> -> vector<64x2xf32>
    %c0_27 = arith.constant 0 : index
    %c0_28 = arith.constant 0 : index
    %132 = vector.load %arg11[%c0_27, %c0_28] : memref<32x64xf32, #tpu.memory_space<vmem>>, vector<32x64xf32>
    %cst_29 = arith.constant dense<0.000000e+00> : vector<32x2xf32>
    %133 = tpu.matmul %132, %131, %cst_29 {dimension_numbers = #tpu.dot_dimension_numbers<[1], [0], [0], [1], [0, 0, 1, 1], [], []>} : vector<32x64xf32>, vector<64x2xf32>, vector<32x2xf32> -> vector<32x2xf32>
    %c0_30 = arith.constant 0 : index
    %c0_31 = arith.constant 0 : index
    %134 = vector.load %arg12[%c0_30, %c0_31] : memref<32x1xf32, #tpu.memory_space<vmem>>, vector<32x1xf32>
    %135 = vector.broadcast %134 : vector<32x1xf32> to vector<32x2xf32>
    %136 = arith.addf %133, %135 : vector<32x2xf32>
    %cst_32 = arith.constant 0.000000e+00 : f32
    %137 = vector.broadcast %cst_32 : f32 to vector<32x2xf32>
    %138 = arith.maximumf %136, %137 : vector<32x2xf32>
    %c0_33 = arith.constant 0 : index
    %c0_34 = arith.constant 0 : index
    %139 = vector.load %arg13[%c0_33, %c0_34] : memref<16x32xf32, #tpu.memory_space<vmem>>, vector<16x32xf32>
    %cst_35 = arith.constant dense<0.000000e+00> : vector<16x2xf32>
    %140 = tpu.matmul %139, %138, %cst_35 {dimension_numbers = #tpu.dot_dimension_numbers<[1], [0], [0], [1], [0, 0, 1, 1], [], []>} : vector<16x32xf32>, vector<32x2xf32>, vector<16x2xf32> -> vector<16x2xf32>
    %c0_36 = arith.constant 0 : index
    %c0_37 = arith.constant 0 : index
    %141 = vector.load %arg14[%c0_36, %c0_37] : memref<16x1xf32, #tpu.memory_space<vmem>>, vector<16x1xf32>
    %142 = vector.broadcast %141 : vector<16x1xf32> to vector<16x2xf32>
    %143 = arith.addf %140, %142 : vector<16x2xf32>
    %cst_38 = arith.constant 0.000000e+00 : f32
    %144 = vector.broadcast %cst_38 : f32 to vector<16x2xf32>
    %145 = arith.maximumf %143, %144 : vector<16x2xf32>
    %c0_39 = arith.constant 0 : index
    %c0_40 = arith.constant 0 : index
    %146 = vector.load %arg15[%c0_39, %c0_40] : memref<10x16xf32, #tpu.memory_space<vmem>>, vector<10x16xf32>
    %cst_41 = arith.constant dense<0.000000e+00> : vector<10x2xf32>
    %147 = tpu.matmul %146, %145, %cst_41 {dimension_numbers = #tpu.dot_dimension_numbers<[1], [0], [0], [1], [0, 0, 1, 1], [], []>} : vector<10x16xf32>, vector<16x2xf32>, vector<10x2xf32> -> vector<10x2xf32>
    %c0_42 = arith.constant 0 : index
    %c0_43 = arith.constant 0 : index
    %148 = vector.load %arg16[%c0_42, %c0_43] : memref<10x1xf32, #tpu.memory_space<vmem>>, vector<10x1xf32>
    %149 = vector.broadcast %148 : vector<10x1xf32> to vector<10x2xf32>
    %150 = arith.addf %147, %149 : vector<10x2xf32>
    %c0_44 = arith.constant 0 : index
    %c0_45 = arith.constant 0 : index
    %151 = vector.load %arg17[%c0_44, %c0_45] : memref<10x2xf32, #tpu.memory_space<vmem>>, vector<10x2xf32>
    tpu.vector_store %arg17[%c0_44, %c0_45], %150 {strides = array<i32>} : memref<10x2xf32, #tpu.memory_space<vmem>>, vector<10x2xf32>,
    return
  }
  func.func @transform_0(%arg0: i32) -> (i32, i32) {
    %c0_i32 = arith.constant 0 : i32
    %c0_i32_0 = arith.constant 0 : i32
    %c0_i32_1 = arith.constant 0 : i32
    return %c0_i32, %c0_i32_0 : i32, i32
  }
  func.func @transform_1(%arg0: i32) -> (i32, i32) {
    %c0_i32 = arith.constant 0 : i32
    %c0_i32_0 = arith.constant 0 : i32
    %c0_i32_1 = arith.constant 0 : i32
    return %c0_i32, %c0_i32_0 : i32, i32
  }
  func.func @transform_2(%arg0: i32) -> (i32, i32) {
    %c0_i32 = arith.constant 0 : i32
    %c0_i32_0 = arith.constant 0 : i32
    %c0_i32_1 = arith.constant 0 : i32
    return %c0_i32, %c0_i32_0 : i32, i32
  }
  func.func @transform_3(%arg0: i32) -> (i32, i32) {
    %c0_i32 = arith.constant 0 : i32
    %c0_i32_0 = arith.constant 0 : i32
    %c0_i32_1 = arith.constant 0 : i32
    return %c0_i32, %c0_i32_0 : i32, i32
  }
  func.func @transform_4(%arg0: i32) -> (i32, i32) {
    %c0_i32 = arith.constant 0 : i32
    %c0_i32_0 = arith.constant 0 : i32
    %c0_i32_1 = arith.constant 0 : i32
    return %c0_i32, %c0_i32_0 : i32, i32
  }
  func.func @transform_5(%arg0: i32) -> (i32, i32) {
    %c0_i32 = arith.constant 0 : i32
    %c0_i32_0 = arith.constant 0 : i32
    %c0_i32_1 = arith.constant 0 : i32
    return %c0_i32, %c0_i32_0 : i32, i32
  }
  func.func @transform_6(%arg0: i32) -> (i32, i32) {
    %c0_i32 = arith.constant 0 : i32
    %c0_i32_0 = arith.constant 0 : i32
    %c0_i32_1 = arith.constant 0 : i32
    return %c0_i32, %c0_i32_0 : i32, i32
  }
  func.func @transform_7(%arg0: i32) -> (i32, i32) {
    %c0_i32 = arith.constant 0 : i32
    %c0_i32_0 = arith.constant 0 : i32
    %c0_i32_1 = arith.constant 0 : i32
    return %c0_i32, %c0_i32_0 : i32, i32
  }
  func.func @transform_8(%arg0: i32) -> (i32, i32) {
    %c0_i32 = arith.constant 0 : i32
    %c0_i32_0 = arith.constant 0 : i32
    %c0_i32_1 = arith.constant 0 : i32
    return %c0_i32, %c0_i32_0 : i32, i32
  }
  func.func @transform_9(%arg0: i32) -> (i32, i32) {
    %c0_i32 = arith.constant 0 : i32
    %c0_i32_0 = arith.constant 0 : i32
    %c0_i32_1 = arith.constant 0 : i32
    return %c0_i32, %c0_i32_0 : i32, i32
  }
  func.func @transform_10(%arg0: i32) -> (i32, i32) {
    %c0_i32 = arith.constant 0 : i32
    %c0_i32_0 = arith.constant 0 : i32
    %c0_i32_1 = arith.constant 0 : i32
    return %c0_i32, %c0_i32_0 : i32, i32
  }
  func.func @transform_11(%arg0: i32) -> (i32, i32) {
    %c0_i32 = arith.constant 0 : i32
    %c0_i32_0 = arith.constant 0 : i32
    %c0_i32_1 = arith.constant 0 : i32
    return %c0_i32, %c0_i32_0 : i32, i32
  }
  func.func @transform_12(%arg0: i32) -> (i32, i32) {
    %c0_i32 = arith.constant 0 : i32
    %c0_i32_0 = arith.constant 0 : i32
    %c0_i32_1 = arith.constant 0 : i32
    return %c0_i32, %c0_i32_0 : i32, i32
  }
  func.func @transform_13(%arg0: i32) -> (i32, i32) {
    %c0_i32 = arith.constant 0 : i32
    %c0_i32_0 = arith.constant 0 : i32
    %c0_i32_1 = arith.constant 0 : i32
    return %c0_i32, %c0_i32_0 : i32, i32
  }
  func.func @transform_14(%arg0: i32) -> (i32, i32) {
    %c0_i32 = arith.constant 0 : i32
    %c0_i32_0 = arith.constant 0 : i32
    %c0_i32_1 = arith.constant 0 : i32
    return %c0_i32, %c0_i32_0 : i32, i32
  }
  func.func @transform_15(%arg0: i32) -> (i32, i32) {
    %c0_i32 = arith.constant 0 : i32
    %c0_i32_0 = arith.constant 0 : i32
    %c0_i32_1 = arith.constant 0 : i32
    return %c0_i32, %c0_i32_0 : i32, i32
  }
  func.func @transform_16(%arg0: i32) -> (i32, i32) {
    %c0_i32 = arith.constant 0 : i32
    %c0_i32_0 = arith.constant 0 : i32
    %c0_i32_1 = arith.constant 0 : i32
    return %c0_i32, %c0_i32_0 : i32, i32
  }
}

</mosaic_0001>

<llo_original>
// kernel: convnet_forward.1
$region0: #{convnet_forward.1}
  #allocation0 [shape = 'u32[]', space=smem, size = 0x4, offset = 0x4, fixed_abs, tag = 'smem constant byte address 0x4 - core index']
  #allocation1 [shape = 'u32[144,128]{1,0:T(1,128)}', space=vmem, size = 0x12000, scoped, tag = 'internal scratch']
  %s0 = inlined_call_operand.vmem [shape: f32[1,648], index: 0, kind: input, shape index: {}]
  %s1 = inlined_call_operand.vmem [shape: f32[4,9], index: 1, kind: input, shape index: {}]
  %s2 = inlined_call_operand.vmem [shape: f32[4,1], index: 2, kind: input, shape index: {}]
  %s3 = inlined_call_operand.vmem [shape: f32[648,200], index: 3, kind: input, shape index: {}]
  %s4 = inlined_call_operand.vmem [shape: f32[8,36], index: 4, kind: input, shape index: {}]
  %s5 = inlined_call_operand.vmem [shape: f32[8,1], index: 5, kind: input, shape index: {}]
  %s6 = inlined_call_operand.vmem [shape: f32[200,72], index: 6, kind: input, shape index: {}]
  %s7 = inlined_call_operand.vmem [shape: f32[16,72], index: 7, kind: input, shape index: {}]
  %s8 = inlined_call_operand.vmem [shape: f32[16,1], index: 8, kind: input, shape index: {}]
  %s9 = inlined_call_operand.vmem [shape: f32[72,8], index: 9, kind: input, shape index: {}]
  %s10 = inlined_call_operand.vmem [shape: f32[32,64], index: 10, kind: input, shape index: {}]
  %s11 = inlined_call_operand.vmem [shape: f32[32,1], index: 11, kind: input, shape index: {}]
  %s12 = inlined_call_operand.vmem [shape: f32[16,32], index: 12, kind: input, shape index: {}]
  %s13 = inlined_call_operand.vmem [shape: f32[16,1], index: 13, kind: input, shape index: {}]
  %s14 = inlined_call_operand.vmem [shape: f32[10,16], index: 14, kind: input, shape index: {}]
  %s15 = inlined_call_operand.vmem [shape: f32[10,1], index: 15, kind: input, shape index: {}]
  %s16 = inlined_call_operand.vmem [shape: f32[10,2], index: 16, kind: output, shape index: {}]
  %s17 = sld [smem:[#allocation0]]
  $region74: #{convnet_forward.1} parent=0
    _
  %s19 = ssub.s32 1, %s17
  %s20 = scalar_select 0, %s19, %s17
  // Predicated region
  $region2: #{convnet_forward.1} parent=0 // pred_check
    _
  $region3: #{convnet_forward.1} parent=0 // pred_check_branch
    %22 = sbr.rel (0) target = $region5
  $region4: #{convnet_forward.1} parent=0 // pred_region
    _
  $region5: #{convnet_forward.1} parent=0 // pred_fallthru
    _
  // Predicated region
  $region6: #{convnet_forward.1} parent=0 // pred_check
    _
  $region7: #{convnet_forward.1} parent=0 // pred_check_branch
    %24 = sbr.rel (0) target = $region9
  $region8: #{convnet_forward.1} parent=0 // pred_region
    _
  $region9: #{convnet_forward.1} parent=0 // pred_fallthru
    _
  // Predicated region
  $region10: #{convnet_forward.1} parent=0 // pred_check
    _
  $region11: #{convnet_forward.1} parent=0 // pred_check_branch
    %26 = sbr.rel (0) target = $region13
  $region12: #{convnet_forward.1} parent=0 // pred_region
    _
  $region13: #{convnet_forward.1} parent=0 // pred_fallthru
    _
  // Predicated region
  $region14: #{convnet_forward.1} parent=0 // pred_check
    _
  $region15: #{convnet_forward.1} parent=0 // pred_check_branch
    %28 = sbr.rel (0) target = $region17
  $region16: #{convnet_forward.1} parent=0 // pred_region
    _
  $region17: #{convnet_forward.1} parent=0 // pred_fallthru
    _
  // Predicated region
  $region18: #{convnet_forward.1} parent=0 // pred_check
    _
  $region19: #{convnet_forward.1} parent=0 // pred_check_branch
    %30 = sbr.rel (0) target = $region21
  $region20: #{convnet_forward.1} parent=0 // pred_region
    _
  $region21: #{convnet_forward.1} parent=0 // pred_fallthru
    _
  // Predicated region
  $region22: #{convnet_forward.1} parent=0 // pred_check
    _
  $region23: #{convnet_forward.1} parent=0 // pred_check_branch
    %32 = sbr.rel (0) target = $region25
  $region24: #{convnet_forward.1} parent=0 // pred_region
    _
  $region25: #{convnet_forward.1} parent=0 // pred_fallthru
    _
  // Predicated region
  $region26: #{convnet_forward.1} parent=0 // pred_check
    _
  $region27: #{convnet_forward.1} parent=0 // pred_check_branch
    %34 = sbr.rel (0) target = $region29
  $region28: #{convnet_forward.1} parent=0 // pred_region
    _
  $region29: #{convnet_forward.1} parent=0 // pred_fallthru
    _
  // Predicated region
  $region30: #{convnet_forward.1} parent=0 // pred_check
    _
  $region31: #{convnet_forward.1} parent=0 // pred_check_branch
    %36 = sbr.rel (0) target = $region33
  $region32: #{convnet_forward.1} parent=0 // pred_region
    _
  $region33: #{convnet_forward.1} parent=0 // pred_fallthru
    _
  // Predicated region
  $region34: #{convnet_forward.1} parent=0 // pred_check
    _
  $region35: #{convnet_forward.1} parent=0 // pred_check_branch
    %38 = sbr.rel (0) target = $region37
  $region36: #{convnet_forward.1} parent=0 // pred_region
    _
  $region37: #{convnet_forward.1} parent=0 // pred_fallthru
    _
  // Predicated region
  $region38: #{convnet_forward.1} parent=0 // pred_check
    _
  $region39: #{convnet_forward.1} parent=0 // pred_check_branch
    %40 = sbr.rel (0) target = $region41
  $region40: #{convnet_forward.1} parent=0 // pred_region
    _
  $region41: #{convnet_forward.1} parent=0 // pred_fallthru
    _
  // Predicated region
  $region42: #{convnet_forward.1} parent=0 // pred_check
    _
  $region43: #{convnet_forward.1} parent=0 // pred_check_branch
    %42 = sbr.rel (0) target = $region45
  $region44: #{convnet_forward.1} parent=0 // pred_region
    _
  $region45: #{convnet_forward.1} parent=0 // pred_fallthru
    _
  // Predicated region
  $region46: #{convnet_forward.1} parent=0 // pred_check
    _
  $region47: #{convnet_forward.1} parent=0 // pred_check_branch
    %44 = sbr.rel (0) target = $region49
  $region48: #{convnet_forward.1} parent=0 // pred_region
    _
  $region49: #{convnet_forward.1} parent=0 // pred_fallthru
    _
  // Predicated region
  $region50: #{convnet_forward.1} parent=0 // pred_check
    _
  $region51: #{convnet_forward.1} parent=0 // pred_check_branch
    %46 = sbr.rel (0) target = $region53
  $region52: #{convnet_forward.1} parent=0 // pred_region
    _
  $region53: #{convnet_forward.1} parent=0 // pred_fallthru
    _
  // Predicated region
  $region54: #{convnet_forward.1} parent=0 // pred_check
    _
  $region55: #{convnet_forward.1} parent=0 // pred_check_branch
    %48 = sbr.rel (0) target = $region57
  $region56: #{convnet_forward.1} parent=0 // pred_region
    _
  $region57: #{convnet_forward.1} parent=0 // pred_fallthru
    _
  // Predicated region
  $region58: #{convnet_forward.1} parent=0 // pred_check
    _
  $region59: #{convnet_forward.1} parent=0 // pred_check_branch
    %50 = sbr.rel (0) target = $region61
  $region60: #{convnet_forward.1} parent=0 // pred_region
    _
  $region61: #{convnet_forward.1} parent=0 // pred_fallthru
    _
  // Predicated region
  $region62: #{convnet_forward.1} parent=0 // pred_check
    _
  $region63: #{convnet_forward.1} parent=0 // pred_check_branch
    %52 = sbr.rel (0) target = $region65
  $region64: #{convnet_forward.1} parent=0 // pred_region
    _
  $region65: #{convnet_forward.1} parent=0 // pred_fallthru
    _
  %v53 = vld [vmem:[%s0] sm:$0x3f]
  %v54 = vld [vmem:[%s1] sm:$0xf]
  %v55 = vld [vmem:[%s2] sm:$0xf]
  %v57 = vlaneseq
  %v58 = vshrl.u32 %v57, 7
  %v59 = vsub.s32 4, %v58
  %v60 = vrot.slane %v53, %v59
  %v61 = vlaneseq
  %v62 = vshrl.u32 %v61, 7
  %v63 = vsub.s32 5, %v62
  %v64 = vrot.slane %v53, %v63
  %65 = vrot.lane.b32.xlu0 %v60, 11
  %v66 = vpop.permute.xlu0 %65
  %67 = vrot.lane.b32.xlu0 %v64, 11
  %v68 = vpop.permute.xlu0 %67
  %vm69 = vcmask 89088
  %v70 = vsel %vm69, %v66, %v68
  %v72 = vlaneseq
  %v73 = vshrl.u32 %v72, 7
  %v74 = vsub.s32 0, %v73
  %v75 = vrot.slane %v53, %v74
  %v76 = vlaneseq
  %v77 = vshrl.u32 %v76, 7
  %v78 = vsub.s32 1, %v77
  %v79 = vrot.slane %v53, %v78
  %v80 = vlaneseq
  %v81 = vshrl.u32 %v80, 7
  %v82 = vsub.s32 2, %v81
  %v83 = vrot.slane %v53, %v82
  %v84 = vlaneseq
  %v85 = vshrl.u32 %v84, 7
  %v86 = vsub.s32 3, %v85
  %v87 = vrot.slane %v53, %v86
  %88 = vrot.lane.b32.xlu0 %v75, 19
  %v89 = vpop.permute.xlu0 %88
  %90 = vrot.lane.b32.xlu0 %v79, 19
  %v91 = vpop.permute.xlu0 %90
  %92 = vrot.lane.b32.xlu0 %v83, 19
  %v93 = vpop.permute.xlu0 %92
  %94 = vrot.lane.b32.xlu0 %v87, 19
  %v95 = vpop.permute.xlu0 %94
  %96 = vrot.lane.b32.xlu0 %v60, 19
  %v97 = vpop.permute.xlu0 %96
  %vm98 = vcmask 154624
  %v99 = vsel %vm98, %v89, %v91
  %v100 = vsel %vm98, %v91, %v93
  %v101 = vsel %vm98, %v93, %v95
  %v102 = vsel %vm98, %v95, %v97
  %v109 = vsel %vm98, %v70, %v89
  %110 = vrot.lane.b32.xlu0 %v60, 10
  %v111 = vpop.permute.xlu0 %110
  %112 = vrot.lane.b32.xlu0 %v64, 10
  %v113 = vpop.permute.xlu0 %112
  %vm114 = vcmask 80896
  %v115 = vsel %vm114, %v111, %v113
  %117 = vrot.lane.b32.xlu0 %v75, 18
  %v118 = vpop.permute.xlu0 %117
  %119 = vrot.lane.b32.xlu0 %v79, 18
  %v120 = vpop.permute.xlu0 %119
  %121 = vrot.lane.b32.xlu0 %v83, 18
  %v122 = vpop.permute.xlu0 %121
  %123 = vrot.lane.b32.xlu0 %v87, 18
  %v124 = vpop.permute.xlu0 %123
  %125 = vrot.lane.b32.xlu0 %v60, 18
  %v126 = vpop.permute.xlu0 %125
  %vm127 = vcmask 146432
  %v128 = vsel %vm127, %v118, %v120
  %v129 = vsel %vm127, %v120, %v122
  %v130 = vsel %vm127, %v122, %v124
  %v131 = vsel %vm127, %v124, %v126
  %v133 = vsel %vm127, %v115, %v118
  %134 = vrot.lane.b32.xlu0 %v60, 9
  %v135 = vpop.permute.xlu0 %134
  %136 = vrot.lane.b32.xlu0 %v64, 9
  %v137 = vpop.permute.xlu0 %136
  %vm138 = vcmask 72704
  %v139 = vsel %vm138, %v135, %v137
  %141 = vrot.lane.b32.xlu0 %v75, 17
  %v142 = vpop.permute.xlu0 %141
  %143 = vrot.lane.b32.xlu0 %v79, 17
  %v144 = vpop.permute.xlu0 %143
  %145 = vrot.lane.b32.xlu0 %v83, 17
  %v146 = vpop.permute.xlu0 %145
  %147 = vrot.lane.b32.xlu0 %v87, 17
  %v148 = vpop.permute.xlu0 %147
  %149 = vrot.lane.b32.xlu0 %v60, 17
  %v150 = vpop.permute.xlu0 %149
  %vm151 = vcmask 138240
  %v152 = vsel %vm151, %v142, %v144
  %v153 = vsel %vm151, %v144, %v146
  %v154 = vsel %vm151, %v146, %v148
  %v155 = vsel %vm151, %v148, %v150
  %v157 = vsel %vm151, %v139, %v142
  %158 = vrot.lane.b32.xlu0 %v64, 121
  %v159 = vpop.permute.xlu0 %158
  %161 = vrot.lane.b32.xlu0 %v75, 1
  %v162 = vpop.permute.xlu0 %161
  %163 = vrot.lane.b32.xlu0 %v79, 1
  %v164 = vpop.permute.xlu0 %163
  %165 = vrot.lane.b32.xlu0 %v83, 1
  %v166 = vpop.permute.xlu0 %165
  %167 = vrot.lane.b32.xlu0 %v87, 1
  %v168 = vpop.permute.xlu0 %167
  %169 = vrot.lane.b32.xlu0 %v60, 1
  %v170 = vpop.permute.xlu0 %169
  %171 = vrot.lane.b32.xlu0 %v64, 1
  %v172 = vpop.permute.xlu0 %171
  %vm173 = vcmask 7168
  %v174 = vsel %vm173, %v162, %v164
  %v175 = vsel %vm173, %v164, %v166
  %v176 = vsel %vm173, %v166, %v168
  %v177 = vsel %vm173, %v168, %v170
  %v178 = vsel %vm173, %v170, %v172
  %v180 = vsel %vm173, %v159, %v162
  %181 = vrot.lane.b32.xlu0 %v75, 127
  %v182 = vpop.permute.xlu0 %181
  %183 = vrot.lane.b32.xlu0 %v79, 127
  %v184 = vpop.permute.xlu0 %183
  %185 = vrot.lane.b32.xlu0 %v83, 127
  %v186 = vpop.permute.xlu0 %185
  %187 = vrot.lane.b32.xlu0 %v87, 127
  %v188 = vpop.permute.xlu0 %187
  %189 = vrot.lane.b32.xlu0 %v60, 127
  %v190 = vpop.permute.xlu0 %189
  %191 = vrot.lane.b32.xlu0 %v64, 127
  %v192 = vpop.permute.xlu0 %191
  %vm193 = vcmask 1039360
  %v194 = vsel %vm193, %v182, %v184
  %v195 = vsel %vm193, %v184, %v186
  %v196 = vsel %vm193, %v186, %v188
  %v197 = vsel %vm193, %v188, %v190
  %v198 = vsel %vm193, %v190, %v192
  %200 = vrot.lane.b32.xlu0 %v75, 7
  %v201 = vpop.permute.xlu0 %200
  %vm203 = vcmask 56320
  %v204 = vsel %vm203, %v192, %v201
  %205 = vrot.lane.b32.xlu0 %v75, 111
  %v206 = vpop.permute.xlu0 %205
  %207 = vrot.lane.b32.xlu0 %v79, 111
  %v208 = vpop.permute.xlu0 %207
  %209 = vrot.lane.b32.xlu0 %v83, 111
  %v210 = vpop.permute.xlu0 %209
  %211 = vrot.lane.b32.xlu0 %v87, 111
  %v212 = vpop.permute.xlu0 %211
  %213 = vrot.lane.b32.xlu0 %v60, 111
  %v214 = vpop.permute.xlu0 %213
  %215 = vrot.lane.b32.xlu0 %v64, 111
  %v216 = vpop.permute.xlu0 %215
  %vm217 = vcmask 908288
  %v218 = vsel %vm217, %v206, %v208
  %v219 = vsel %vm217, %v208, %v210
  %v220 = vsel %vm217, %v210, %v212
  %v221 = vsel %vm217, %v212, %v214
  %v222 = vsel %vm217, %v214, %v216
  %224 = vrot.lane.b32.xlu0 %v75, 119
  %v225 = vpop.permute.xlu0 %224
  %vm227 = vcmask 973824
  %v228 = vsel %vm227, %v222, %v225
  %229 = vrot.lane.b32.xlu0 %v75, 110
  %v230 = vpop.permute.xlu0 %229
  %231 = vrot.lane.b32.xlu0 %v79, 110
  %v232 = vpop.permute.xlu0 %231
  %233 = vrot.lane.b32.xlu0 %v83, 110
  %v234 = vpop.permute.xlu0 %233
  %235 = vrot.lane.b32.xlu0 %v87, 110
  %v236 = vpop.permute.xlu0 %235
  %237 = vrot.lane.b32.xlu0 %v60, 110
  %v238 = vpop.permute.xlu0 %237
  %239 = vrot.lane.b32.xlu0 %v64, 110
  %v240 = vpop.permute.xlu0 %239
  %vm241 = vcmask 900096
  %v242 = vsel %vm241, %v230, %v232
  %v243 = vsel %vm241, %v232, %v234
  %v244 = vsel %vm241, %v234, %v236
  %v245 = vsel %vm241, %v236, %v238
  %v246 = vsel %vm241, %v238, %v240
  %248 = vrot.lane.b32.xlu0 %v75, 118
  %v249 = vpop.permute.xlu0 %248
  %vm251 = vcmask 965632
  %v252 = vsel %vm251, %v246, %v249
  %253 = vrot.lane.b32.xlu0 %v75, 109
  %v254 = vpop.permute.xlu0 %253
  %255 = vrot.lane.b32.xlu0 %v79, 109
  %v256 = vpop.permute.xlu0 %255
  %257 = vrot.lane.b32.xlu0 %v83, 109
  %v258 = vpop.permute.xlu0 %257
  %259 = vrot.lane.b32.xlu0 %v87, 109
  %v260 = vpop.permute.xlu0 %259
  %261 = vrot.lane.b32.xlu0 %v60, 109
  %v262 = vpop.permute.xlu0 %261
  %263 = vrot.lane.b32.xlu0 %v64, 109
  %v264 = vpop.permute.xlu0 %263
  %vm265 = vcmask 891904
  %v266 = vsel %vm265, %v254, %v256
  %v267 = vsel %vm265, %v256, %v258
  %v268 = vsel %vm265, %v258, %v260
  %v269 = vsel %vm265, %v260, %v262
  %v270 = vsel %vm265, %v262, %v264
  %272 = vrot.lane.b32.xlu0 %v75, 117
  %v273 = vpop.permute.xlu0 %272
  %vm275 = vcmask 957440
  %v276 = vsel %vm275, %v270, %v273
  %v278 = vrot.slane %v133, 7
  %v279 = vrot.slane %v128, 7
  %v280 = vrot.slane %v129, 7
  %v281 = vrot.slane %v130, 7
  %v282 = vrot.slane %v131, 7
  %v283 = vrot.slane %v126, 7
  %v291 = vrot.slane %v157, 6
  %v292 = vrot.slane %v152, 6
  %v293 = vrot.slane %v153, 6
  %v294 = vrot.slane %v154, 6
  %v295 = vrot.slane %v155, 6
  %v296 = vrot.slane %v150, 6
  %v304 = vrot.slane %v180, 5
  %v305 = vrot.slane %v174, 5
  %v306 = vrot.slane %v175, 5
  %v307 = vrot.slane %v176, 5
  %v308 = vrot.slane %v177, 5
  %v309 = vrot.slane %v178, 5
  %v323 = vrot.slane %v194, 3
  %v324 = vrot.slane %v195, 3
  %v325 = vrot.slane %v196, 3
  %v326 = vrot.slane %v197, 3
  %v327 = vrot.slane %v198, 3
  %v328 = vrot.slane %v204, 3
  %v336 = vrot.slane %v218, 2
  %v337 = vrot.slane %v219, 2
  %v338 = vrot.slane %v220, 2
  %v339 = vrot.slane %v221, 2
  %v340 = vrot.slane %v228, 2
  %v341 = vrot.slane %v225, 2
  %v349 = vrot.slane %v242, 1
  %v350 = vrot.slane %v243, 1
  %v351 = vrot.slane %v244, 1
  %v352 = vrot.slane %v245, 1
  %v353 = vrot.slane %v252, 1
  %v354 = vrot.slane %v249, 1
  %vm361 = vcmask 1040384
  %v362 = vsel %vm361, %v109, %v278
  %v363 = vsel %vm361, %v99, %v279
  %v364 = vsel %vm361, %v100, %v280
  %v365 = vsel %vm361, %v101, %v281
  %v366 = vsel %vm361, %v102, %v282
  %v367 = vsel %vm361, %v97, %v283
  %vm368 = vcmask 1041408
  %v369 = vsel %vm368, %v362, %v291
  %v370 = vsel %vm368, %v363, %v292
  %v371 = vsel %vm368, %v364, %v293
  %v372 = vsel %vm368, %v365, %v294
  %v373 = vsel %vm368, %v366, %v295
  %v374 = vsel %vm368, %v367, %v296
  %vm375 = vcmask 1042432
  %v376 = vsel %vm375, %v369, %v304
  %v377 = vsel %vm375, %v370, %v305
  %v378 = vsel %vm375, %v371, %v306
  %v379 = vsel %vm375, %v372, %v307
  %v380 = vsel %vm375, %v373, %v308
  %v381 = vsel %vm375, %v374, %v309
  %vm382 = vcmask 1043456
  %v383 = vsel %vm382, %v376, %v75
  %v384 = vsel %vm382, %v377, %v79
  %v385 = vsel %vm382, %v378, %v83
  %v386 = vsel %vm382, %v379, %v87
  %v387 = vsel %vm382, %v380, %v60
  %v388 = vsel %vm382, %v381, %v64
  %vm389 = vcmask 1044480
  %v390 = vsel %vm389, %v383, %v323
  %v391 = vsel %vm389, %v384, %v324
  %v392 = vsel %vm389, %v385, %v325
  %v393 = vsel %vm389, %v386, %v326
  %v394 = vsel %vm389, %v387, %v327
  %v395 = vsel %vm389, %v388, %v328
  %vm396 = vcmask 1045504
  %v397 = vsel %vm396, %v390, %v336
  %v398 = vsel %vm396, %v391, %v337
  %v399 = vsel %vm396, %v392, %v338
  %v400 = vsel %vm396, %v393, %v339
  %v401 = vsel %vm396, %v394, %v340
  %v402 = vsel %vm396, %v395, %v341
  %vm403 = vcmask 1046528
  %v404 = vsel %vm403, %v397, %v349
  %v405 = vsel %vm403, %v398, %v350
  %v406 = vsel %vm403, %v399, %v351
  %v407 = vsel %vm403, %v400, %v352
  %v408 = vsel %vm403, %v401, %v353
  %v409 = vsel %vm403, %v402, %v354
  %411 = vset.pattern.permute.xlu0 0
  %412 = vperm.xlu0 %411, %v55
  %v413 = vpop.permute.xlu0 %412
  %v416 = vsel %vm138, %v54, 0
  %v418 = vsel %vm361, %v266, 0
  %v420 = vsel %vm361, %v267, 0
  %v422 = vsel %vm361, %v268, 0
  %v424 = vsel %vm361, %v269, 0
  %v427 = vsel %vm361, %v276, 0
  %v429 = vsel %vm361, %v273, 0
  %431 = vmatprep.subr.mxu0 %v405
  %432 = vmatpush1.msra.mxu0 %v404
  %433 = vmatprep.subr.mxu0 %v420
  %434 = vmatpush1.msra.mxu0 %v418
  %435 = vmatprep.subr.mxu0 0.0
  %436 = vmatpush1.msra.mxu0 0.0
  %437 = vmatprep.subr.mxu0 0.0
  %438 = vmatpush1.msra.mxu0 0.0
  %439 = vmatprep.subr.mxu0 0.0
  %440 = vmatpush1.msra.mxu0 0.0
  %441 = vmatprep.subr.mxu0 0.0
  %442 = vmatpush1.msra.mxu0 0.0
  %443 = vmatprep.subr.mxu0 0.0
  %444 = vmatpush1.msra.mxu0 0.0
  %445 = vmatprep.subr.mxu0 0.0
  %446 = vmatpush1.msra.mxu0 0.0
  %447 = vmatprep.subr.mxu0 0.0
  %448 = vmatpush1.msra.mxu0 0.0
  %449 = vmatprep.subr.mxu0 0.0
  %450 = vmatpush1.msra.mxu0 0.0
  %451 = vmatprep.subr.mxu0 0.0
  %452 = vmatpush1.msra.mxu0 0.0
  %453 = vmatprep.subr.mxu0 0.0
  %454 = vmatpush1.msra.mxu0 0.0
  %455 = vmatprep.subr.mxu0 0.0
  %456 = vmatpush1.msra.mxu0 0.0
  %457 = vmatprep.subr.mxu0 0.0
  %458 = vmatpush1.msra.mxu0 0.0
  %459 = vmatprep.subr.mxu0 0.0
  %460 = vmatpush1.msra.mxu0 0.0
  %461 = vmatprep.subr.mxu0 0.0
  %462 = vmatpush1.msra.mxu0 0.0
  %463 = vmatprep.subr.mxu0 0.0
  %464 = vmatpush1.msra.mxu0 0.0
  %465 = vmatprep.subr.mxu0 0.0
  %466 = vmatpush1.msra.mxu0 0.0
  %467 = vmatprep.subr.mxu0 0.0
  %468 = vmatpush1.msra.mxu0 0.0
  %469 = vmatprep.subr.mxu0 0.0
  %470 = vmatpush1.msra.mxu0 0.0
  %471 = vmatprep.subr.mxu0 0.0
  %472 = vmatpush1.msra.mxu0 0.0
  %473 = vmatprep.subr.mxu0 0.0
  %474 = vmatpush1.msra.mxu0 0.0
  %475 = vmatprep.subr.mxu0 0.0
  %476 = vmatpush1.msra.mxu0 0.0
  %477 = vmatprep.subr.mxu0 0.0
  %478 = vmatpush1.msra.mxu0 0.0
  %479 = vmatprep.subr.mxu0 0.0
  %480 = vmatpush1.msra.mxu0 0.0
  %481 = vmatprep.subr.mxu0 0.0
  %482 = vmatpush1.msra.mxu0 0.0
  %483 = vmatprep.subr.mxu0 0.0
  %484 = vmatpush1.msra.mxu0 0.0
  %485 = vmatprep.subr.mxu0 0.0
  %486 = vmatpush1.msra.mxu0 0.0
  %487 = vmatprep.subr.mxu0 0.0
  %488 = vmatpush1.msra.mxu0 0.0
  %489 = vmatprep.subr.mxu0 0.0
  %490 = vmatpush1.msra.mxu0 0.0
  %491 = vmatprep.subr.mxu0 0.0
  %492 = vmatpush1.msra.mxu0 0.0
  %493 = vmatprep.subr.mxu0 0.0
  %494 = vmatpush1.msra.mxu0 0.0
  %495 = vmatprep.mubr.f32.mxu0 0.0
  %496 = vmatmul.mubr.f32.gmra.mrb[0].mxu0 %v416
  %v497 = vpop.f32.mrb[0].mxu0
  %v498 = vadd.f32 %v413, %v497
  %v499 = vpop.f32.mrb[0].mxu0
  %v500 = vadd.f32 %v413, %v499
  %501 = vdwg.mxu0
  %502 = vmatprep.subr.mxu0 %v407
  %503 = vmatpush1.msra.mxu0 %v406
  %504 = vmatprep.subr.mxu0 %v424
  %505 = vmatpush1.msra.mxu0 %v422
  %506 = vmatprep.subr.mxu0 0.0
  %507 = vmatpush1.msra.mxu0 0.0
  %508 = vmatprep.subr.mxu0 0.0
  %509 = vmatpush1.msra.mxu0 0.0
  %510 = vmatprep.subr.mxu0 0.0
  %511 = vmatpush1.msra.mxu0 0.0
  %512 = vmatprep.subr.mxu0 0.0
  %513 = vmatpush1.msra.mxu0 0.0
  %514 = vmatprep.subr.mxu0 0.0
  %515 = vmatpush1.msra.mxu0 0.0
  %516 = vmatprep.subr.mxu0 0.0
  %517 = vmatpush1.msra.mxu0 0.0
  %518 = vmatprep.subr.mxu0 0.0
  %519 = vmatpush1.msra.mxu0 0.0
  %520 = vmatprep.subr.mxu0 0.0
  %521 = vmatpush1.msra.mxu0 0.0
  %522 = vmatprep.subr.mxu0 0.0
  %523 = vmatpush1.msra.mxu0 0.0
  %524 = vmatprep.subr.mxu0 0.0
  %525 = vmatpush1.msra.mxu0 0.0
  %526 = vmatprep.subr.mxu0 0.0
  %527 = vmatpush1.msra.mxu0 0.0
  %528 = vmatprep.subr.mxu0 0.0
  %529 = vmatpush1.msra.mxu0 0.0
  %530 = vmatprep.subr.mxu0 0.0
  %531 = vmatpush1.msra.mxu0 0.0
  %532 = vmatprep.subr.mxu0 0.0
  %533 = vmatpush1.msra.mxu0 0.0
  %534 = vmatprep.subr.mxu0 0.0
  %535 = vmatpush1.msra.mxu0 0.0
  %536 = vmatprep.subr.mxu0 0.0
  %537 = vmatpush1.msra.mxu0 0.0
  %538 = vmatprep.subr.mxu0 0.0
  %539 = vmatpush1.msra.mxu0 0.0
  %540 = vmatprep.subr.mxu0 0.0
  %541 = vmatpush1.msra.mxu0 0.0
  %542 = vmatprep.subr.mxu0 0.0
  %543 = vmatpush1.msra.mxu0 0.0
  %544 = vmatprep.subr.mxu0 0.0
  %545 = vmatpush1.msra.mxu0 0.0
  %546 = vmatprep.subr.mxu0 0.0
  %547 = vmatpush1.msra.mxu0 0.0
  %548 = vmatprep.subr.mxu0 0.0
  %549 = vmatpush1.msra.mxu0 0.0
  %550 = vmatprep.subr.mxu0 0.0
  %551 = vmatpush1.msra.mxu0 0.0
  %552 = vmatprep.subr.mxu0 0.0
  %553 = vmatpush1.msra.mxu0 0.0
  %554 = vmatprep.subr.mxu0 0.0
  %555 = vmatpush1.msra.mxu0 0.0
  %556 = vmatprep.subr.mxu0 0.0
  %557 = vmatpush1.msra.mxu0 0.0
  %558 = vmatprep.subr.mxu0 0.0
  %559 = vmatpush1.msra.mxu0 0.0
  %560 = vmatprep.subr.mxu0 0.0
  %561 = vmatpush1.msra.mxu0 0.0
  %562 = vmatprep.subr.mxu0 0.0
  %563 = vmatpush1.msra.mxu0 0.0
  %564 = vmatprep.subr.mxu0 0.0
  %565 = vmatpush1.msra.mxu0 0.0
  %566 = vmatprep.mubr.f32.mxu0 0.0
  %567 = vmatmul.mubr.f32.gmra.mrb[0].mxu0 %v416
  %v568 = vpop.f32.mrb[0].mxu0
  %v569 = vadd.f32 %v413, %v568
  %v570 = vpop.f32.mrb[0].mxu0
  %v571 = vadd.f32 %v413, %v570
  %572 = vdwg.mxu0
  %573 = vmatprep.subr.mxu0 %v409
  %574 = vmatpush1.msra.mxu0 %v408
  %575 = vmatprep.subr.mxu0 %v429
  %576 = vmatpush1.msra.mxu0 %v427
  %577 = vmatprep.subr.mxu0 0.0
  %578 = vmatpush1.msra.mxu0 0.0
  %579 = vmatprep.subr.mxu0 0.0
  %580 = vmatpush1.msra.mxu0 0.0
  %581 = vmatprep.subr.mxu0 0.0
  %582 = vmatpush1.msra.mxu0 0.0
  %583 = vmatprep.subr.mxu0 0.0
  %584 = vmatpush1.msra.mxu0 0.0
  %585 = vmatprep.subr.mxu0 0.0
  %586 = vmatpush1.msra.mxu0 0.0
  %587 = vmatprep.subr.mxu0 0.0
  %588 = vmatpush1.msra.mxu0 0.0
  %589 = vmatprep.subr.mxu0 0.0
  %590 = vmatpush1.msra.mxu0 0.0
  %591 = vmatprep.subr.mxu0 0.0
  %592 = vmatpush1.msra.mxu0 0.0
  %593 = vmatprep.subr.mxu0 0.0
  %594 = vmatpush1.msra.mxu0 0.0
  %595 = vmatprep.subr.mxu0 0.0
  %596 = vmatpush1.msra.mxu0 0.0
  %597 = vmatprep.subr.mxu0 0.0
  %598 = vmatpush1.msra.mxu0 0.0
  %599 = vmatprep.subr.mxu0 0.0
  %600 = vmatpush1.msra.mxu0 0.0
  %601 = vmatprep.subr.mxu0 0.0
  %602 = vmatpush1.msra.mxu0 0.0
  %603 = vmatprep.subr.mxu0 0.0
  %604 = vmatpush1.msra.mxu0 0.0
  %605 = vmatprep.subr.mxu0 0.0
  %606 = vmatpush1.msra.mxu0 0.0
  %607 = vmatprep.subr.mxu0 0.0
  %608 = vmatpush1.msra.mxu0 0.0
  %609 = vmatprep.subr.mxu0 0.0
  %610 = vmatpush1.msra.mxu0 0.0
  %611 = vmatprep.subr.mxu0 0.0
  %612 = vmatpush1.msra.mxu0 0.0
  %613 = vmatprep.subr.mxu0 0.0
  %614 = vmatpush1.msra.mxu0 0.0
  %615 = vmatprep.subr.mxu0 0.0
  %616 = vmatpush1.msra.mxu0 0.0
  %617 = vmatprep.subr.mxu0 0.0
  %618 = vmatpush1.msra.mxu0 0.0
  %619 = vmatprep.subr.mxu0 0.0
  %620 = vmatpush1.msra.mxu0 0.0
  %621 = vmatprep.subr.mxu0 0.0
  %622 = vmatpush1.msra.mxu0 0.0
  %623 = vmatprep.subr.mxu0 0.0
  %624 = vmatpush1.msra.mxu0 0.0
  %625 = vmatprep.subr.mxu0 0.0
  %626 = vmatpush1.msra.mxu0 0.0
  %627 = vmatprep.subr.mxu0 0.0
  %628 = vmatpush1.msra.mxu0 0.0
  %629 = vmatprep.subr.mxu0 0.0
  %630 = vmatpush1.msra.mxu0 0.0
  %631 = vmatprep.subr.mxu0 0.0
  %632 = vmatpush1.msra.mxu0 0.0
  %633 = vmatprep.subr.mxu0 0.0
  %634 = vmatpush1.msra.mxu0 0.0
  %635 = vmatprep.subr.mxu0 0.0
  %636 = vmatpush1.msra.mxu0 0.0
  %637 = vmatprep.mubr.f32.mxu0 0.0
  %638 = vmatmul.mubr.f32.gmra.mrb[0].mxu0 %v416
  %v639 = vpop.f32.mrb[0].mxu0
  %v640 = vadd.f32 %v413, %v639
  %v641 = vpop.f32.mrb[0].mxu0
  %v642 = vadd.f32 %v413, %v641
  %643 = vdwg.mxu0
  %v644 = vmax.f32 %v498, 0.0
  %v645 = vmax.f32 %v500, 0.0
  %v646 = vmax.f32 %v569, 0.0
  %v647 = vmax.f32 %v571, 0.0
  %v648 = vmax.f32 %v640, 0.0
  %v649 = vmax.f32 %v642, 0.0
  %656 = vrot.lane.b32.xlu0 %v644, 127
  %v657 = vpop.permute.xlu0 %656
  %658 = vrot.lane.b32.xlu0 %v645, 127
  %v659 = vpop.permute.xlu0 %658
  %660 = vrot.lane.b32.xlu0 %v646, 127
  %v661 = vpop.permute.xlu0 %660
  %662 = vrot.lane.b32.xlu0 %v647, 127
  %v663 = vpop.permute.xlu0 %662
  %664 = vrot.lane.b32.xlu0 %v648, 127
  %v665 = vpop.permute.xlu0 %664
  %666 = vrot.lane.b32.xlu0 %v649, 127
  %v667 = vpop.permute.xlu0 %666
  %v668 = vsel %vm193, %v657, %v659
  %v669 = vsel %vm193, %v659, %v661
  %v670 = vsel %vm193, %v661, %v663
  %v671 = vsel %vm193, %v663, %v665
  %v672 = vsel %vm193, %v665, %v667
  %679 = vrot.lane.b32.xlu0 %v644, 7
  %v680 = vpop.permute.xlu0 %679
  %v682 = vsel %vm203, %v667, %v680
  %v683 = vmax.f32 %v644, %v668
  %v684 = vmax.f32 %v645, %v669
  %v685 = vmax.f32 %v646, %v670
  %v686 = vmax.f32 %v647, %v671
  %v687 = vmax.f32 %v648, %v672
  %v688 = vmax.f32 %v649, %v682
  %695 = vrot.lane.b32.xlu0 %v683, 110
  %v696 = vpop.permute.xlu0 %695
  %697 = vrot.lane.b32.xlu0 %v684, 110
  %v698 = vpop.permute.xlu0 %697
  %699 = vrot.lane.b32.xlu0 %v685, 110
  %v700 = vpop.permute.xlu0 %699
  %701 = vrot.lane.b32.xlu0 %v686, 110
  %v702 = vpop.permute.xlu0 %701
  %703 = vrot.lane.b32.xlu0 %v687, 110
  %v704 = vpop.permute.xlu0 %703
  %705 = vrot.lane.b32.xlu0 %v688, 110
  %v706 = vpop.permute.xlu0 %705
  %v707 = vsel %vm241, %v696, %v698
  %v708 = vsel %vm241, %v698, %v700
  %v709 = vsel %vm241, %v700, %v702
  %v710 = vsel %vm241, %v702, %v704
  %v711 = vsel %vm241, %v704, %v706
  %717 = vrot.lane.b32.xlu0 %v683, 118
  %v718 = vpop.permute.xlu0 %717
  %v720 = vsel %vm251, %v711, %v718
  %v721 = vmax.f32 %v683, %v707
  %v722 = vmax.f32 %v684, %v708
  %v723 = vmax.f32 %v685, %v709
  %v724 = vmax.f32 %v686, %v710
  %v725 = vmax.f32 %v687, %v720
  %v726 = vmax.f32 %v688, %v718
  %v727 = vld [vmem:[%s3] sm:$0xff]
  %v728 = vld [vmem:[%s3 + $0x8] sm:$0xff]
  %v729 = vld [vmem:[%s3 + $0x10] sm:$0xff]
  %v730 = vld [vmem:[%s3 + $0x18] sm:$0xff]
  %v731 = vld [vmem:[%s3 + $0x20] sm:$0xff]
  %v732 = vld [vmem:[%s3 + $0x28] sm:$0xff]
  %v733 = vld [vmem:[%s3 + $0x30] sm:$0xff]
  %v734 = vld [vmem:[%s3 + $0x38] sm:$0xff]
  %v735 = vld [vmem:[%s3 + $0x40] sm:$0xff]
  %v736 = vld [vmem:[%s3 + $0x48] sm:$0xff]
  %v737 = vld [vmem:[%s3 + $0x50] sm:$0xff]
  %v738 = vld [vmem:[%s3 + $0x58] sm:$0xff]
  %v739 = vld [vmem:[%s3 + $0x60] sm:$0xff]
  %v740 = vld [vmem:[%s3 + $0x68] sm:$0xff]
  %v741 = vld [vmem:[%s3 + $0x70] sm:$0xff]
  %v742 = vld [vmem:[%s3 + $0x78] sm:$0xff]
  %v743 = vld [vmem:[%s3 + $0x80] sm:$0xff]
  %v744 = vld [vmem:[%s3 + $0x88] sm:$0xff]
  %v745 = vld [vmem:[%s3 + $0x90] sm:$0xff]
  %v746 = vld [vmem:[%s3 + $0x98] sm:$0xff]
  %v747 = vld [vmem:[%s3 + $0xa0] sm:$0xff]
  %v748 = vld [vmem:[%s3 + $0xa8] sm:$0xff]
  %v749 = vld [vmem:[%s3 + $0xb0] sm:$0xff]
  %v750 = vld [vmem:[%s3 + $0xb8] sm:$0xff]
  %v751 = vld [vmem:[%s3 + $0xc0] sm:$0xff]
  %v752 = vld [vmem:[%s3 + $0xc8] sm:$0xff]
  %v753 = vld [vmem:[%s3 + $0xd0] sm:$0xff]
  %v754 = vld [vmem:[%s3 + $0xd8] sm:$0xff]
  %v755 = vld [vmem:[%s3 + $0xe0] sm:$0xff]
  %v756 = vld [vmem:[%s3 + $0xe8] sm:$0xff]
  %v757 = vld [vmem:[%s3 + $0xf0] sm:$0xff]
  %v758 = vld [vmem:[%s3 + $0xf8] sm:$0xff]
  %v759 = vld [vmem:[%s3 + $0x100] sm:$0xff]
  %v760 = vld [vmem:[%s3 + $0x108] sm:$0xff]
  %v761 = vld [vmem:[%s3 + $0x110] sm:$0xff]
  %v762 = vld [vmem:[%s3 + $0x118] sm:$0xff]
  %v763 = vld [vmem:[%s3 + $0x120] sm:$0xff]
  %v764 = vld [vmem:[%s3 + $0x128] sm:$0xff]
  %v765 = vld [vmem:[%s3 + $0x130] sm:$0xff]
  %v766 = vld [vmem:[%s3 + $0x138] sm:$0xff]
  %v767 = vld [vmem:[%s3 + $0x140] sm:$0xff]
  %v768 = vld [vmem:[%s3 + $0x148] sm:$0xff]
  %v769 = vld [vmem:[%s3 + $0x150] sm:$0xff]
  %v770 = vld [vmem:[%s3 + $0x158] sm:$0xff]
  %v771 = vld [vmem:[%s3 + $0x160] sm:$0xff]
  %v772 = vld [vmem:[%s3 + $0x168] sm:$0xff]
  %v773 = vld [vmem:[%s3 + $0x170] sm:$0xff]
  %v774 = vld [vmem:[%s3 + $0x178] sm:$0xff]
  %v775 = vld [vmem:[%s3 + $0x180] sm:$0xff]
  %v776 = vld [vmem:[%s3 + $0x188] sm:$0xff]
  %v777 = vld [vmem:[%s3 + $0x190] sm:$0xff]
  %v778 = vld [vmem:[%s3 + $0x198] sm:$0xff]
  %v779 = vld [vmem:[%s3 + $0x1a0] sm:$0xff]
  %v780 = vld [vmem:[%s3 + $0x1a8] sm:$0xff]
  %v781 = vld [vmem:[%s3 + $0x1b0] sm:$0xff]
  %v782 = vld [vmem:[%s3 + $0x1b8] sm:$0xff]
  %v783 = vld [vmem:[%s3 + $0x1c0] sm:$0xff]
  %v784 = vld [vmem:[%s3 + $0x1c8] sm:$0xff]
  %v785 = vld [vmem:[%s3 + $0x1d0] sm:$0xff]
  %v786 = vld [vmem:[%s3 + $0x1d8] sm:$0xff]
  %v787 = vld [vmem:[%s3 + $0x1e0] sm:$0xff]
  %v788 = vld [vmem:[%s3 + $0x1e8] sm:$0xff]
  %v789 = vld [vmem:[%s3 + $0x1f0] sm:$0xff]
  %v790 = vld [vmem:[%s3 + $0x1f8] sm:$0xff]
  %v791 = vld [vmem:[%s3 + $0x200] sm:$0xff]
  %v792 = vld [vmem:[%s3 + $0x208] sm:$0xff]
  %v793 = vld [vmem:[%s3 + $0x210] sm:$0xff]
  %v794 = vld [vmem:[%s3 + $0x218] sm:$0xff]
  %v795 = vld [vmem:[%s3 + $0x220] sm:$0xff]
  %v796 = vld [vmem:[%s3 + $0x228] sm:$0xff]
  %v797 = vld [vmem:[%s3 + $0x230] sm:$0xff]
  %v798 = vld [vmem:[%s3 + $0x238] sm:$0xff]
  %v799 = vld [vmem:[%s3 + $0x240] sm:$0xff]
  %v800 = vld [vmem:[%s3 + $0x248] sm:$0xff]
  %v801 = vld [vmem:[%s3 + $0x250] sm:$0xff]
  %v802 = vld [vmem:[%s3 + $0x258] sm:$0xff]
  %v803 = vld [vmem:[%s3 + $0x260] sm:$0xff]
  %v804 = vld [vmem:[%s3 + $0x268] sm:$0xff]
  %v805 = vld [vmem:[%s3 + $0x270] sm:$0xff]
  %v806 = vld [vmem:[%s3 + $0x278] sm:$0xff]
  %v807 = vld [vmem:[%s3 + $0x280] sm:$0xff]
  %v808 = vld [vmem:[%s3 + $0x288] sm:$0xff]
  %v809 = vld [vmem:[%s3 + $0x290] sm:$0xff]
  %v810 = vld [vmem:[%s3 + $0x298] sm:$0xff]
  %v811 = vld [vmem:[%s3 + $0x2a0] sm:$0xff]
  %v812 = vld [vmem:[%s3 + $0x2a8] sm:$0xff]
  %v813 = vld [vmem:[%s3 + $0x2b0] sm:$0xff]
  %v814 = vld [vmem:[%s3 + $0x2b8] sm:$0xff]
  %v815 = vld [vmem:[%s3 + $0x2c0] sm:$0xff]
  %v816 = vld [vmem:[%s3 + $0x2c8] sm:$0xff]
  %v817 = vld [vmem:[%s3 + $0x2d0] sm:$0xff]
  %v818 = vld [vmem:[%s3 + $0x2d8] sm:$0xff]
  %v819 = vld [vmem:[%s3 + $0x2e0] sm:$0xff]
  %v820 = vld [vmem:[%s3 + $0x2e8] sm:$0xff]
  %v821 = vld [vmem:[%s3 + $0x2f0] sm:$0xff]
  %v822 = vld [vmem:[%s3 + $0x2f8] sm:$0xff]
  %v823 = vld [vmem:[%s3 + $0x300] sm:$0xff]
  %v824 = vld [vmem:[%s3 + $0x308] sm:$0xff]
  %v825 = vld [vmem:[%s3 + $0x310] sm:$0xff]
  %v826 = vld [vmem:[%s3 + $0x318] sm:$0xff]
  %v827 = vld [vmem:[%s3 + $0x320] sm:$0xff]
  %v828 = vld [vmem:[%s3 + $0x328] sm:$0xff]
  %v829 = vld [vmem:[%s3 + $0x330] sm:$0xff]
  %v830 = vld [vmem:[%s3 + $0x338] sm:$0xff]
  %v831 = vld [vmem:[%s3 + $0x340] sm:$0xff]
  %v832 = vld [vmem:[%s3 + $0x348] sm:$0xff]
  %v833 = vld [vmem:[%s3 + $0x350] sm:$0xff]
  %v834 = vld [vmem:[%s3 + $0x358] sm:$0xff]
  %v835 = vld [vmem:[%s3 + $0x360] sm:$0xff]
  %v836 = vld [vmem:[%s3 + $0x368] sm:$0xff]
  %v837 = vld [vmem:[%s3 + $0x370] sm:$0xff]
  %v838 = vld [vmem:[%s3 + $0x378] sm:$0xff]
  %v839 = vld [vmem:[%s3 + $0x380] sm:$0xff]
  %v840 = vld [vmem:[%s3 + $0x388] sm:$0xff]
  %v841 = vld [vmem:[%s3 + $0x390] sm:$0xff]
  %v842 = vld [vmem:[%s3 + $0x398] sm:$0xff]
  %v843 = vld [vmem:[%s3 + $0x3a0] sm:$0xff]
  %v844 = vld [vmem:[%s3 + $0x3a8] sm:$0xff]
  %v845 = vld [vmem:[%s3 + $0x3b0] sm:$0xff]
  %v846 = vld [vmem:[%s3 + $0x3b8] sm:$0xff]
  %v847 = vld [vmem:[%s3 + $0x3c0] sm:$0xff]
  %v848 = vld [vmem:[%s3 + $0x3c8] sm:$0xff]
  %v849 = vld [vmem:[%s3 + $0x3d0] sm:$0xff]
  %v850 = vld [vmem:[%s3 + $0x3d8] sm:$0xff]
  %v851 = vld [vmem:[%s3 + $0x3e0] sm:$0xff]
  %v852 = vld [vmem:[%s3 + $0x3e8] sm:$0xff]
  %v853 = vld [vmem:[%s3 + $0x3f0] sm:$0xff]
  %v854 = vld [vmem:[%s3 + $0x3f8] sm:$0xff]
  %v855 = vld [vmem:[%s3 + $0x400] sm:$0xff]
  %v856 = vld [vmem:[%s3 + $0x408] sm:$0xff]
  %v857 = vld [vmem:[%s3 + $0x410] sm:$0xff]
  %v858 = vld [vmem:[%s3 + $0x418] sm:$0xff]
  %v859 = vld [vmem:[%s3 + $0x420] sm:$0xff]
  %v860 = vld [vmem:[%s3 + $0x428] sm:$0xff]
  %v861 = vld [vmem:[%s3 + $0x430] sm:$0xff]
  %v862 = vld [vmem:[%s3 + $0x438] sm:$0xff]
  %v863 = vld [vmem:[%s3 + $0x440] sm:$0xff]
  %v864 = vld [vmem:[%s3 + $0x448] sm:$0xff]
  %v865 = vld [vmem:[%s3 + $0x450] sm:$0xff]
  %v866 = vld [vmem:[%s3 + $0x458] sm:$0xff]
  %v867 = vld [vmem:[%s3 + $0x460] sm:$0xff]
  %v868 = vld [vmem:[%s3 + $0x468] sm:$0xff]
  %v869 = vld [vmem:[%s3 + $0x470] sm:$0xff]
  %v870 = vld [vmem:[%s3 + $0x478] sm:$0xff]
  %v871 = vld [vmem:[%s3 + $0x480] sm:$0xff]
  %v872 = vld [vmem:[%s3 + $0x488] sm:$0xff]
  %v873 = vld [vmem:[%s3 + $0x490] sm:$0xff]
  %v874 = vld [vmem:[%s3 + $0x498] sm:$0xff]
  %v875 = vld [vmem:[%s3 + $0x4a0] sm:$0xff]
  %v876 = vld [vmem:[%s3 + $0x4a8] sm:$0xff]
  %v877 = vld [vmem:[%s3 + $0x4b0] sm:$0xff]
  %v878 = vld [vmem:[%s3 + $0x4b8] sm:$0xff]
  %v879 = vld [vmem:[%s3 + $0x4c0] sm:$0xff]
  %v880 = vld [vmem:[%s3 + $0x4c8] sm:$0xff]
  %v881 = vld [vmem:[%s3 + $0x4d0] sm:$0xff]
  %v882 = vld [vmem:[%s3 + $0x4d8] sm:$0xff]
  %v883 = vld [vmem:[%s3 + $0x4e0] sm:$0xff]
  %v884 = vld [vmem:[%s3 + $0x4e8] sm:$0xff]
  %v885 = vld [vmem:[%s3 + $0x4f0] sm:$0xff]
  %v886 = vld [vmem:[%s3 + $0x4f8] sm:$0xff]
  %v887 = vld [vmem:[%s3 + $0x500] sm:$0xff]
  %v888 = vld [vmem:[%s3 + $0x508] sm:$0xff]
  %vm889 = vcmask 64512
  %v891 = vsel %vm889, %v726, 0
  %893 = vmatprep.subr.mxu0 %v728
  %894 = vmatpush1.msra.mxu0 %v727
  %895 = vmatprep.subr.mxu0 %v730
  %896 = vmatpush1.msra.mxu0 %v729
  %897 = vmatprep.subr.mxu0 %v732
  %898 = vmatpush1.msra.mxu0 %v731
  %899 = vmatprep.subr.mxu0 %v734
  %900 = vmatpush1.msra.mxu0 %v733
  %901 = vmatprep.subr.mxu0 %v736
  %902 = vmatpush1.msra.mxu0 %v735
  %903 = vmatprep.subr.mxu0 %v738
  %904 = vmatpush1.msra.mxu0 %v737
  %905 = vmatprep.subr.mxu0 %v740
  %906 = vmatpush1.msra.mxu0 %v739
  %907 = vmatprep.subr.mxu0 %v742
  %908 = vmatpush1.msra.mxu0 %v741
  %909 = vmatprep.subr.mxu0 %v744
  %910 = vmatpush1.msra.mxu0 %v743
  %911 = vmatprep.subr.mxu0 %v746
  %912 = vmatpush1.msra.mxu0 %v745
  %913 = vmatprep.subr.mxu0 %v748
  %914 = vmatpush1.msra.mxu0 %v747
  %915 = vmatprep.subr.mxu0 %v750
  %916 = vmatpush1.msra.mxu0 %v749
  %917 = vmatprep.subr.mxu0 %v752
  %918 = vmatpush1.msra.mxu0 %v751
  %919 = vmatprep.subr.mxu0 %v754
  %920 = vmatpush1.msra.mxu0 %v753
  %921 = vmatprep.subr.mxu0 %v756
  %922 = vmatpush1.msra.mxu0 %v755
  %923 = vmatprep.subr.mxu0 %v758
  %924 = vmatpush1.msra.mxu0 %v757
  %925 = vmatprep.subr.mxu0 %v760
  %926 = vmatpush1.msra.mxu0 %v759
  %927 = vmatprep.subr.mxu0 %v762
  %928 = vmatpush1.msra.mxu0 %v761
  %929 = vmatprep.subr.mxu0 %v764
  %930 = vmatpush1.msra.mxu0 %v763
  %931 = vmatprep.subr.mxu0 %v766
  %932 = vmatpush1.msra.mxu0 %v765
  %933 = vmatprep.subr.mxu0 %v768
  %934 = vmatpush1.msra.mxu0 %v767
  %935 = vmatprep.subr.mxu0 %v770
  %936 = vmatpush1.msra.mxu0 %v769
  %937 = vmatprep.subr.mxu0 %v772
  %938 = vmatpush1.msra.mxu0 %v771
  %939 = vmatprep.subr.mxu0 %v774
  %940 = vmatpush1.msra.mxu0 %v773
  %941 = vmatprep.subr.mxu0 %v776
  %942 = vmatpush1.msra.mxu0 %v775
  %943 = vmatprep.subr.mxu0 %v778
  %944 = vmatpush1.msra.mxu0 %v777
  %945 = vmatprep.subr.mxu0 %v780
  %946 = vmatpush1.msra.mxu0 %v779
  %947 = vmatprep.subr.mxu0 %v782
  %948 = vmatpush1.msra.mxu0 %v781
  %949 = vmatprep.subr.mxu0 %v784
  %950 = vmatpush1.msra.mxu0 %v783
  %951 = vmatprep.subr.mxu0 %v786
  %952 = vmatpush1.msra.mxu0 %v785
  %953 = vmatprep.subr.mxu0 %v788
  %954 = vmatpush1.msra.mxu0 %v787
  %955 = vmatprep.subr.mxu0 %v790
  %956 = vmatpush1.msra.mxu0 %v789
  %957 = vmatprep.mubr.f32.mxu0 %v722
  %958 = vmatmul.mubr.f32.gmra.mrb[0].mxu0 %v721
  %v959 = vpop.f32.mrb[0].mxu0
  %v960 = vadd.f32 0.0, %v959
  %v961 = vpop.f32.mrb[0].mxu0
  %v962 = vadd.f32 0.0, %v961
  %963 = vdwg.mxu0
  %964 = vmatprep.subr.mxu0 %v792
  %965 = vmatpush1.msra.mxu0 %v791
  %966 = vmatprep.subr.mxu0 %v794
  %967 = vmatpush1.msra.mxu0 %v793
  %968 = vmatprep.subr.mxu0 %v796
  %969 = vmatpush1.msra.mxu0 %v795
  %970 = vmatprep.subr.mxu0 %v798
  %971 = vmatpush1.msra.mxu0 %v797
  %972 = vmatprep.subr.mxu0 %v800
  %973 = vmatpush1.msra.mxu0 %v799
  %974 = vmatprep.subr.mxu0 %v802
  %975 = vmatpush1.msra.mxu0 %v801
  %976 = vmatprep.subr.mxu0 %v804
  %977 = vmatpush1.msra.mxu0 %v803
  %978 = vmatprep.subr.mxu0 %v806
  %979 = vmatpush1.msra.mxu0 %v805
  %980 = vmatprep.subr.mxu0 %v808
  %981 = vmatpush1.msra.mxu0 %v807
  %982 = vmatprep.subr.mxu0 %v810
  %983 = vmatpush1.msra.mxu0 %v809
  %984 = vmatprep.subr.mxu0 %v812
  %985 = vmatpush1.msra.mxu0 %v811
  %986 = vmatprep.subr.mxu0 %v814
  %987 = vmatpush1.msra.mxu0 %v813
  %988 = vmatprep.subr.mxu0 %v816
  %989 = vmatpush1.msra.mxu0 %v815
  %990 = vmatprep.subr.mxu0 %v818
  %991 = vmatpush1.msra.mxu0 %v817
  %992 = vmatprep.subr.mxu0 %v820
  %993 = vmatpush1.msra.mxu0 %v819
  %994 = vmatprep.subr.mxu0 %v822
  %995 = vmatpush1.msra.mxu0 %v821
  %996 = vmatprep.subr.mxu0 %v824
  %997 = vmatpush1.msra.mxu0 %v823
  %998 = vmatprep.subr.mxu0 %v826
  %999 = vmatpush1.msra.mxu0 %v825
  %1000 = vmatprep.subr.mxu0 %v828
  %1001 = vmatpush1.msra.mxu0 %v827
  %1002 = vmatprep.subr.mxu0 %v830
  %1003 = vmatpush1.msra.mxu0 %v829
  %1004 = vmatprep.subr.mxu0 %v832
  %1005 = vmatpush1.msra.mxu0 %v831
  %1006 = vmatprep.subr.mxu0 %v834
  %1007 = vmatpush1.msra.mxu0 %v833
  %1008 = vmatprep.subr.mxu0 %v836
  %1009 = vmatpush1.msra.mxu0 %v835
  %1010 = vmatprep.subr.mxu0 %v838
  %1011 = vmatpush1.msra.mxu0 %v837
  %1012 = vmatprep.subr.mxu0 %v840
  %1013 = vmatpush1.msra.mxu0 %v839
  %1014 = vmatprep.subr.mxu0 %v842
  %1015 = vmatpush1.msra.mxu0 %v841
  %1016 = vmatprep.subr.mxu0 %v844
  %1017 = vmatpush1.msra.mxu0 %v843
  %1018 = vmatprep.subr.mxu0 %v846
  %1019 = vmatpush1.msra.mxu0 %v845
  %1020 = vmatprep.subr.mxu0 %v848
  %1021 = vmatpush1.msra.mxu0 %v847
  %1022 = vmatprep.subr.mxu0 %v850
  %1023 = vmatpush1.msra.mxu0 %v849
  %1024 = vmatprep.subr.mxu0 %v852
  %1025 = vmatpush1.msra.mxu0 %v851
  %1026 = vmatprep.subr.mxu0 %v854
  %1027 = vmatpush1.msra.mxu0 %v853
  %1028 = vmatprep.mubr.f32.mxu0 %v724
  %1029 = vmatmul.mubr.f32.gmra.mrb[0].mxu0 %v723
  %v1030 = vpop.f32.mrb[0].mxu0
  %v1031 = vadd.f32 %v960, %v1030
  %v1032 = vpop.f32.mrb[0].mxu0
  %v1033 = vadd.f32 %v962, %v1032
  %1034 = vdwg.mxu0
  %1035 = vmatprep.subr.mxu0 %v856
  %1036 = vmatpush1.msra.mxu0 %v855
  %1037 = vmatprep.subr.mxu0 %v858
  %1038 = vmatpush1.msra.mxu0 %v857
  %1039 = vmatprep.subr.mxu0 %v860
  %1040 = vmatpush1.msra.mxu0 %v859
  %1041 = vmatprep.subr.mxu0 %v862
  %1042 = vmatpush1.msra.mxu0 %v861
  %1043 = vmatprep.subr.mxu0 %v864
  %1044 = vmatpush1.msra.mxu0 %v863
  %1045 = vmatprep.subr.mxu0 %v866
  %1046 = vmatpush1.msra.mxu0 %v865
  %1047 = vmatprep.subr.mxu0 %v868
  %1048 = vmatpush1.msra.mxu0 %v867
  %1049 = vmatprep.subr.mxu0 %v870
  %1050 = vmatpush1.msra.mxu0 %v869
  %1051 = vmatprep.subr.mxu0 %v872
  %1052 = vmatpush1.msra.mxu0 %v871
  %1053 = vmatprep.subr.mxu0 %v874
  %1054 = vmatpush1.msra.mxu0 %v873
  %1055 = vmatprep.subr.mxu0 %v876
  %1056 = vmatpush1.msra.mxu0 %v875
  %1057 = vmatprep.subr.mxu0 %v878
  %1058 = vmatpush1.msra.mxu0 %v877
  %1059 = vmatprep.subr.mxu0 %v880
  %1060 = vmatpush1.msra.mxu0 %v879
  %1061 = vmatprep.subr.mxu0 %v882
  %1062 = vmatpush1.msra.mxu0 %v881
  %1063 = vmatprep.subr.mxu0 %v884
  %1064 = vmatpush1.msra.mxu0 %v883
  %1065 = vmatprep.subr.mxu0 %v886
  %1066 = vmatpush1.msra.mxu0 %v885
  %1067 = vmatprep.subr.mxu0 %v888
  %1068 = vmatpush1.msra.mxu0 %v887
  %1069 = vmatprep.subr.mxu0 0.0
  %1070 = vmatpush1.msra.mxu0 0.0
  %1071 = vmatprep.subr.mxu0 0.0
  %1072 = vmatpush1.msra.mxu0 0.0
  %1073 = vmatprep.subr.mxu0 0.0
  %1074 = vmatpush1.msra.mxu0 0.0
  %1075 = vmatprep.subr.mxu0 0.0
  %1076 = vmatpush1.msra.mxu0 0.0
  %1077 = vmatprep.subr.mxu0 0.0
  %1078 = vmatpush1.msra.mxu0 0.0
  %1079 = vmatprep.subr.mxu0 0.0
  %1080 = vmatpush1.msra.mxu0 0.0
  %1081 = vmatprep.subr.mxu0 0.0
  %1082 = vmatpush1.msra.mxu0 0.0
  %1083 = vmatprep.subr.mxu0 0.0
  %1084 = vmatpush1.msra.mxu0 0.0
  %1085 = vmatprep.subr.mxu0 0.0
  %1086 = vmatpush1.msra.mxu0 0.0
  %1087 = vmatprep.subr.mxu0 0.0
  %1088 = vmatpush1.msra.mxu0 0.0
  %1089 = vmatprep.subr.mxu0 0.0
  %1090 = vmatpush1.msra.mxu0 0.0
  %1091 = vmatprep.subr.mxu0 0.0
  %1092 = vmatpush1.msra.mxu0 0.0
  %1093 = vmatprep.subr.mxu0 0.0
  %1094 = vmatpush1.msra.mxu0 0.0
  %1095 = vmatprep.subr.mxu0 0.0
  %1096 = vmatpush1.msra.mxu0 0.0
  %1097 = vmatprep.subr.mxu0 0.0
  %1098 = vmatpush1.msra.mxu0 0.0
  %1099 = vmatprep.mubr.f32.mxu0 %v891
  %1100 = vmatmul.mubr.f32.gmra.mrb[0].mxu0 %v725
  %v1101 = vpop.f32.mrb[0].mxu0
  %v1102 = vadd.f32 %v1031, %v1101
  %v1103 = vpop.f32.mrb[0].mxu0
  %v1104 = vadd.f32 %v1033, %v1103
  %1105 = vdwg.mxu0
  %v1106 = vld [vmem:[%s4] sm:$0xff]
  %v1107 = vld [vmem:[%s5] sm:$0xff]
  %1109 = vrot.lane.b32.xlu0 %v1104, 67
  %v1110 = vpop.permute.xlu0 %1109
  %1113 = vrot.lane.b32.xlu0 %v1102, 11
  %v1114 = vpop.permute.xlu0 %1113
  %1115 = vrot.lane.b32.xlu0 %v1104, 11
  %v1116 = vpop.permute.xlu0 %1115
  %v1117 = vsel %vm69, %v1114, %v1116
  %v1120 = vsel %vm69, %v1110, %v1114
  %1121 = vrot.lane.b32.xlu0 %v1104, 66
  %v1122 = vpop.permute.xlu0 %1121
  %1124 = vrot.lane.b32.xlu0 %v1102, 10
  %v1125 = vpop.permute.xlu0 %1124
  %1126 = vrot.lane.b32.xlu0 %v1104, 10
  %v1127 = vpop.permute.xlu0 %1126
  %v1128 = vsel %vm114, %v1125, %v1127
  %v1130 = vsel %vm114, %v1122, %v1125
  %1131 = vrot.lane.b32.xlu0 %v1104, 65
  %v1132 = vpop.permute.xlu0 %1131
  %1134 = vrot.lane.b32.xlu0 %v1102, 9
  %v1135 = vpop.permute.xlu0 %1134
  %1136 = vrot.lane.b32.xlu0 %v1104, 9
  %v1137 = vpop.permute.xlu0 %1136
  %v1138 = vsel %vm138, %v1135, %v1137
  %v1141 = vsel %vm138, %v1132, %v1135
  %1142 = vrot.lane.b32.xlu0 %v1104, 57
  %v1143 = vpop.permute.xlu0 %1142
  %1145 = vrot.lane.b32.xlu0 %v1102, 1
  %v1146 = vpop.permute.xlu0 %1145
  %1147 = vrot.lane.b32.xlu0 %v1104, 1
  %v1148 = vpop.permute.xlu0 %1147
  %v1149 = vsel %vm173, %v1146, %v1148
  %v1151 = vsel %vm173, %v1143, %v1146
  %1152 = vrot.lane.b32.xlu0 %v1102, 127
  %v1153 = vpop.permute.xlu0 %1152
  %1154 = vrot.lane.b32.xlu0 %v1104, 127
  %v1155 = vpop.permute.xlu0 %1154
  %v1156 = vsel %vm193, %v1153, %v1155
  %1158 = vrot.lane.b32.xlu0 %v1102, 71
  %v1159 = vpop.permute.xlu0 %1158
  %vm1161 = vcmask 580608
  %v1162 = vsel %vm1161, %v1155, %v1159
  %1163 = vrot.lane.b32.xlu0 %v1102, 119
  %v1164 = vpop.permute.xlu0 %1163
  %1165 = vrot.lane.b32.xlu0 %v1104, 119
  %v1166 = vpop.permute.xlu0 %1165
  %v1167 = vsel %vm227, %v1164, %v1166
  %1170 = vrot.lane.b32.xlu0 %v1102, 63
  %v1171 = vpop.permute.xlu0 %1170
  %vm1173 = vcmask 515072
  %v1174 = vsel %vm1173, %v1166, %v1171
  %1175 = vrot.lane.b32.xlu0 %v1102, 118
  %v1176 = vpop.permute.xlu0 %1175
  %1177 = vrot.lane.b32.xlu0 %v1104, 118
  %v1178 = vpop.permute.xlu0 %1177
  %v1179 = vsel %vm251, %v1176, %v1178
  %1181 = vrot.lane.b32.xlu0 %v1102, 62
  %v1182 = vpop.permute.xlu0 %1181
  %vm1184 = vcmask 506880
  %v1185 = vsel %vm1184, %v1178, %v1182
  %1186 = vrot.lane.b32.xlu0 %v1102, 117
  %v1187 = vpop.permute.xlu0 %1186
  %1188 = vrot.lane.b32.xlu0 %v1104, 117
  %v1189 = vpop.permute.xlu0 %1188
  %v1190 = vsel %vm275, %v1187, %v1189
  %1192 = vrot.lane.b32.xlu0 %v1102, 61
  %v1193 = vpop.permute.xlu0 %1192
  %vm1195 = vcmask 498688
  %v1196 = vsel %vm1195, %v1189, %v1193
  %v1198 = vrot.slane %v1130, 4
  %v1199 = vrot.slane %v1128, 4
  %v1203 = vrot.slane %v1151, 4
  %v1204 = vrot.slane %v1149, 4
  %v1208 = vrot.slane %v1156, 4
  %v1209 = vrot.slane %v1162, 4
  %v1213 = vrot.slane %v1179, 4
  %v1214 = vrot.slane %v1185, 4
  %v1217 = vsel %vm382, %v1120, %v1198
  %v1218 = vsel %vm382, %v1117, %v1199
  %v1219 = vsel %vm382, %v1141, %v1203
  %v1220 = vsel %vm382, %v1138, %v1204
  %v1221 = vsel %vm382, %v1102, %v1208
  %v1222 = vsel %vm382, %v1104, %v1209
  %v1223 = vsel %vm382, %v1167, %v1213
  %v1224 = vsel %vm382, %v1174, %v1214
  %1226 = vset.pattern.permute.xlu0 0
  %1227 = vperm.xlu0 %1226, %v1107
  %v1228 = vpop.permute.xlu0 %1227
  %vm1230 = vcmask 293888
  %v1232 = vsel %vm1230, %v1106, 0
  %v1234 = vsel %vm382, %v1190, 0
  %v1237 = vsel %vm382, %v1196, 0
  %1239 = vmatprep.subr.mxu0 %v1218
  %1240 = vmatpush1.msra.mxu0 %v1217
  %1241 = vmatprep.subr.mxu0 %v1220
  %1242 = vmatpush1.msra.mxu0 %v1219
  %1243 = vmatprep.subr.mxu0 %v1222
  %1244 = vmatpush1.msra.mxu0 %v1221
  %1245 = vmatprep.subr.mxu0 %v1224
  %1246 = vmatpush1.msra.mxu0 %v1223
  %1247 = vmatprep.subr.mxu0 %v1237
  %1248 = vmatpush1.msra.mxu0 %v1234
  %1249 = vmatprep.subr.mxu0 0.0
  %1250 = vmatpush1.msra.mxu0 0.0
  %1251 = vmatprep.subr.mxu0 0.0
  %1252 = vmatpush1.msra.mxu0 0.0
  %1253 = vmatprep.subr.mxu0 0.0
  %1254 = vmatpush1.msra.mxu0 0.0
  %1255 = vmatprep.subr.mxu0 0.0
  %1256 = vmatpush1.msra.mxu0 0.0
  %1257 = vmatprep.subr.mxu0 0.0
  %1258 = vmatpush1.msra.mxu0 0.0
  %1259 = vmatprep.subr.mxu0 0.0
  %1260 = vmatpush1.msra.mxu0 0.0
  %1261 = vmatprep.subr.mxu0 0.0
  %1262 = vmatpush1.msra.mxu0 0.0
  %1263 = vmatprep.subr.mxu0 0.0
  %1264 = vmatpush1.msra.mxu0 0.0
  %1265 = vmatprep.subr.mxu0 0.0
  %1266 = vmatpush1.msra.mxu0 0.0
  %1267 = vmatprep.subr.mxu0 0.0
  %1268 = vmatpush1.msra.mxu0 0.0
  %1269 = vmatprep.subr.mxu0 0.0
  %1270 = vmatpush1.msra.mxu0 0.0
  %1271 = vmatprep.subr.mxu0 0.0
  %1272 = vmatpush1.msra.mxu0 0.0
  %1273 = vmatprep.subr.mxu0 0.0
  %1274 = vmatpush1.msra.mxu0 0.0
  %1275 = vmatprep.subr.mxu0 0.0
  %1276 = vmatpush1.msra.mxu0 0.0
  %1277 = vmatprep.subr.mxu0 0.0
  %1278 = vmatpush1.msra.mxu0 0.0
  %1279 = vmatprep.subr.mxu0 0.0
  %1280 = vmatpush1.msra.mxu0 0.0
  %1281 = vmatprep.subr.mxu0 0.0
  %1282 = vmatpush1.msra.mxu0 0.0
  %1283 = vmatprep.subr.mxu0 0.0
  %1284 = vmatpush1.msra.mxu0 0.0
  %1285 = vmatprep.subr.mxu0 0.0
  %1286 = vmatpush1.msra.mxu0 0.0
  %1287 = vmatprep.subr.mxu0 0.0
  %1288 = vmatpush1.msra.mxu0 0.0
  %1289 = vmatprep.subr.mxu0 0.0
  %1290 = vmatpush1.msra.mxu0 0.0
  %1291 = vmatprep.subr.mxu0 0.0
  %1292 = vmatpush1.msra.mxu0 0.0
  %1293 = vmatprep.subr.mxu0 0.0
  %1294 = vmatpush1.msra.mxu0 0.0
  %1295 = vmatprep.subr.mxu0 0.0
  %1296 = vmatpush1.msra.mxu0 0.0
  %1297 = vmatprep.subr.mxu0 0.0
  %1298 = vmatpush1.msra.mxu0 0.0
  %1299 = vmatprep.subr.mxu0 0.0
  %1300 = vmatpush1.msra.mxu0 0.0
  %1301 = vmatprep.subr.mxu0 0.0
  %1302 = vmatpush1.msra.mxu0 0.0
  %1303 = vmatprep.mubr.f32.mxu0 0.0
  %1304 = vmatmul.mubr.f32.gmra.mrb[0].mxu0 %v1232
  %v1305 = vpop.f32.mrb[0].mxu0
  %v1306 = vadd.f32 %v1228, %v1305
  %v1307 = vpop.f32.mrb[0].mxu0
  %v1308 = vadd.f32 %v1228, %v1307
  %1309 = vdwg.mxu0
  %v1310 = vmax.f32 %v1306, 0.0
  %v1311 = vmax.f32 %v1308, 0.0
  %1314 = vrot.lane.b32.xlu0 %v1310, 127
  %v1315 = vpop.permute.xlu0 %1314
  %1316 = vrot.lane.b32.xlu0 %v1311, 127
  %v1317 = vpop.permute.xlu0 %1316
  %v1318 = vsel %vm193, %v1315, %v1317
  %1321 = vrot.lane.b32.xlu0 %v1310, 71
  %v1322 = vpop.permute.xlu0 %1321
  %v1324 = vsel %vm1161, %v1317, %v1322
  %v1325 = vmax.f32 %v1310, %v1318
  %v1326 = vmax.f32 %v1311, %v1324
  %1329 = vrot.lane.b32.xlu0 %v1325, 118
  %v1330 = vpop.permute.xlu0 %1329
  %1331 = vrot.lane.b32.xlu0 %v1326, 118
  %v1332 = vpop.permute.xlu0 %1331
  %v1333 = vsel %vm251, %v1330, %v1332
  %1336 = vrot.lane.b32.xlu0 %v1325, 62
  %v1337 = vpop.permute.xlu0 %1336
  %v1339 = vsel %vm1184, %v1332, %v1337
  %v1340 = vmax.f32 %v1325, %v1333
  %v1341 = vmax.f32 %v1326, %v1339
  %v1342 = vld [vmem:[%s6] sm:$0xff]
  %v1343 = vld [vmem:[%s6 + $0x8] sm:$0xff]
  %v1344 = vld [vmem:[%s6 + $0x10] sm:$0xff]
  %v1345 = vld [vmem:[%s6 + $0x18] sm:$0xff]
  %v1346 = vld [vmem:[%s6 + $0x20] sm:$0xff]
  %v1347 = vld [vmem:[%s6 + $0x28] sm:$0xff]
  %v1348 = vld [vmem:[%s6 + $0x30] sm:$0xff]
  %v1349 = vld [vmem:[%s6 + $0x38] sm:$0xff]
  %v1350 = vld [vmem:[%s6 + $0x40] sm:$0xff]
  %v1351 = vld [vmem:[%s6 + $0x48] sm:$0xff]
  %v1352 = vld [vmem:[%s6 + $0x50] sm:$0xff]
  %v1353 = vld [vmem:[%s6 + $0x58] sm:$0xff]
  %v1354 = vld [vmem:[%s6 + $0x60] sm:$0xff]
  %v1355 = vld [vmem:[%s6 + $0x68] sm:$0xff]
  %v1356 = vld [vmem:[%s6 + $0x70] sm:$0xff]
  %v1357 = vld [vmem:[%s6 + $0x78] sm:$0xff]
  %v1358 = vld [vmem:[%s6 + $0x80] sm:$0xff]
  %v1359 = vld [vmem:[%s6 + $0x88] sm:$0xff]
  %v1360 = vld [vmem:[%s6 + $0x90] sm:$0xff]
  %v1361 = vld [vmem:[%s6 + $0x98] sm:$0xff]
  %v1362 = vld [vmem:[%s6 + $0xa0] sm:$0xff]
  %v1363 = vld [vmem:[%s6 + $0xa8] sm:$0xff]
  %v1364 = vld [vmem:[%s6 + $0xb0] sm:$0xff]
  %v1365 = vld [vmem:[%s6 + $0xb8] sm:$0xff]
  %v1366 = vld [vmem:[%s6 + $0xc0] sm:$0xff]
  %vm1367 = vcmask 588800
  %v1369 = vsel %vm1367, %v1341, 0
  %1371 = vmatprep.subr.mxu0 0.0
  %1372 = vmatpush1.msra.mxu0 %v1342
  %1373 = vmatprep.subr.mxu0 0.0
  %1374 = vmatpush1.msra.mxu0 %v1343
  %1375 = vmatprep.subr.mxu0 0.0
  %1376 = vmatpush1.msra.mxu0 %v1344
  %1377 = vmatprep.subr.mxu0 0.0
  %1378 = vmatpush1.msra.mxu0 %v1345
  %1379 = vmatprep.subr.mxu0 0.0
  %1380 = vmatpush1.msra.mxu0 %v1346
  %1381 = vmatprep.subr.mxu0 0.0
  %1382 = vmatpush1.msra.mxu0 %v1347
  %1383 = vmatprep.subr.mxu0 0.0
  %1384 = vmatpush1.msra.mxu0 %v1348
  %1385 = vmatprep.subr.mxu0 0.0
  %1386 = vmatpush1.msra.mxu0 %v1349
  %1387 = vmatprep.subr.mxu0 0.0
  %1388 = vmatpush1.msra.mxu0 %v1350
  %1389 = vmatprep.subr.mxu0 0.0
  %1390 = vmatpush1.msra.mxu0 %v1351
  %1391 = vmatprep.subr.mxu0 0.0
  %1392 = vmatpush1.msra.mxu0 %v1352
  %1393 = vmatprep.subr.mxu0 0.0
  %1394 = vmatpush1.msra.mxu0 %v1353
  %1395 = vmatprep.subr.mxu0 0.0
  %1396 = vmatpush1.msra.mxu0 %v1354
  %1397 = vmatprep.subr.mxu0 0.0
  %1398 = vmatpush1.msra.mxu0 %v1355
  %1399 = vmatprep.subr.mxu0 0.0
  %1400 = vmatpush1.msra.mxu0 %v1356
  %1401 = vmatprep.subr.mxu0 0.0
  %1402 = vmatpush1.msra.mxu0 %v1357
  %1403 = vmatprep.subr.mxu0 0.0
  %1404 = vmatpush1.msra.mxu0 %v1358
  %1405 = vmatprep.subr.mxu0 0.0
  %1406 = vmatpush1.msra.mxu0 %v1359
  %1407 = vmatprep.subr.mxu0 0.0
  %1408 = vmatpush1.msra.mxu0 %v1360
  %1409 = vmatprep.subr.mxu0 0.0
  %1410 = vmatpush1.msra.mxu0 %v1361
  %1411 = vmatprep.subr.mxu0 0.0
  %1412 = vmatpush1.msra.mxu0 %v1362
  %1413 = vmatprep.subr.mxu0 0.0
  %1414 = vmatpush1.msra.mxu0 %v1363
  %1415 = vmatprep.subr.mxu0 0.0
  %1416 = vmatpush1.msra.mxu0 %v1364
  %1417 = vmatprep.subr.mxu0 0.0
  %1418 = vmatpush1.msra.mxu0 %v1365
  %1419 = vmatprep.subr.mxu0 0.0
  %1420 = vmatpush1.msra.mxu0 %v1366
  %1421 = vmatprep.subr.mxu0 0.0
  %1422 = vmatpush1.msra.mxu0 0.0
  %1423 = vmatprep.subr.mxu0 0.0
  %1424 = vmatpush1.msra.mxu0 0.0
  %1425 = vmatprep.subr.mxu0 0.0
  %1426 = vmatpush1.msra.mxu0 0.0
  %1427 = vmatprep.subr.mxu0 0.0
  %1428 = vmatpush1.msra.mxu0 0.0
  %1429 = vmatprep.subr.mxu0 0.0
  %1430 = vmatpush1.msra.mxu0 0.0
  %1431 = vmatprep.subr.mxu0 0.0
  %1432 = vmatpush1.msra.mxu0 0.0
  %1433 = vmatprep.subr.mxu0 0.0
  %1434 = vmatpush1.msra.mxu0 0.0
  %1435 = vmatprep.mubr.f32.mxu0 %v1369
  %1436 = vmatmul.mubr.f32.gmra.mrb[0].mxu0 %v1340
  %v1437 = vpop.f32.mrb[0].mxu0
  %v1438 = vadd.f32 0.0, %v1437
  %v1439 = vpop.f32.mrb[0].mxu0
  %1440 = vdwg.mxu0
  %v1441 = vld [vmem:[%s7] sm:$0xff]
  %v1442 = vld [vmem:[%s7 + $0x8] sm:$0xff]
  %v1443 = vld [vmem:[%s8] sm:$0xff]
  %v1444 = vld [vmem:[%s8 + $0x8] sm:$0xff]
  %1446 = vrot.lane.b32.xlu0 %v1438, 63
  %v1447 = vpop.permute.xlu0 %1446
  %1449 = vrot.lane.b32.xlu0 %v1438, 7
  %v1450 = vpop.permute.xlu0 %1449
  %v1452 = vsel %vm203, %v1447, %v1450
  %1453 = vrot.lane.b32.xlu0 %v1438, 62
  %v1454 = vpop.permute.xlu0 %1453
  %1456 = vrot.lane.b32.xlu0 %v1438, 6
  %v1457 = vpop.permute.xlu0 %1456
  %vm1459 = vcmask 48128
  %v1460 = vsel %vm1459, %v1454, %v1457
  %1461 = vrot.lane.b32.xlu0 %v1438, 61
  %v1462 = vpop.permute.xlu0 %1461
  %1464 = vrot.lane.b32.xlu0 %v1438, 5
  %v1465 = vpop.permute.xlu0 %1464
  %vm1467 = vcmask 39936
  %v1468 = vsel %vm1467, %v1462, %v1465
  %1469 = vrot.lane.b32.xlu0 %v1438, 57
  %v1470 = vpop.permute.xlu0 %1469
  %1472 = vrot.lane.b32.xlu0 %v1438, 1
  %v1473 = vpop.permute.xlu0 %1472
  %v1475 = vsel %vm173, %v1470, %v1473
  %1476 = vrot.lane.b32.xlu0 %v1438, 127
  %v1477 = vpop.permute.xlu0 %1476
  %1479 = vrot.lane.b32.xlu0 %v1438, 71
  %v1480 = vpop.permute.xlu0 %1479
  %v1482 = vsel %vm1161, %v1477, %v1480
  %1483 = vrot.lane.b32.xlu0 %v1438, 123
  %v1484 = vpop.permute.xlu0 %1483
  %1486 = vrot.lane.b32.xlu0 %v1438, 67
  %v1487 = vpop.permute.xlu0 %1486
  %vm1489 = vcmask 547840
  %v1490 = vsel %vm1489, %v1484, %v1487
  %1491 = vrot.lane.b32.xlu0 %v1438, 122
  %v1492 = vpop.permute.xlu0 %1491
  %1494 = vrot.lane.b32.xlu0 %v1438, 66
  %v1495 = vpop.permute.xlu0 %1494
  %vm1497 = vcmask 539648
  %v1498 = vsel %vm1497, %v1492, %v1495
  %1499 = vrot.lane.b32.xlu0 %v1438, 121
  %v1500 = vpop.permute.xlu0 %1499
  %1502 = vrot.lane.b32.xlu0 %v1438, 65
  %v1503 = vpop.permute.xlu0 %1502
  %vm1505 = vcmask 531456
  %v1506 = vsel %vm1505, %v1500, %v1503
  %1508 = vset.pattern.permute.xlu0 0
  %1509 = vperm.xlu0 %1508, %v1443
  %v1510 = vpop.permute.xlu0 %1509
  %1513 = vset.pattern.permute.xlu0 0
  %1514 = vperm.xlu0 %1513, %v1444
  %v1515 = vpop.permute.xlu0 %1514
  %v1518 = vsel %vm1367, %v1441, 0
  %v1521 = vsel %vm1367, %v1442, 0
  %1523 = vmatprep.subr.mxu0 0.0
  %1524 = vmatpush1.msra.mxu0 %v1452
  %1525 = vmatprep.subr.mxu0 0.0
  %1526 = vmatpush1.msra.mxu0 %v1460
  %1527 = vmatprep.subr.mxu0 0.0
  %1528 = vmatpush1.msra.mxu0 %v1468
  %1529 = vmatprep.subr.mxu0 0.0
  %1530 = vmatpush1.msra.mxu0 %v1475
  %1531 = vmatprep.subr.mxu0 0.0
  %1532 = vmatpush1.msra.mxu0 %v1438
  %1533 = vmatprep.subr.mxu0 0.0
  %1534 = vmatpush1.msra.mxu0 %v1482
  %1535 = vmatprep.subr.mxu0 0.0
  %1536 = vmatpush1.msra.mxu0 %v1490
  %1537 = vmatprep.subr.mxu0 0.0
  %1538 = vmatpush1.msra.mxu0 %v1498
  %1539 = vmatprep.subr.mxu0 0.0
  %1540 = vmatpush1.msra.mxu0 %v1506
  %1541 = vmatprep.subr.mxu0 0.0
  %1542 = vmatpush1.msra.mxu0 0.0
  %1543 = vmatprep.subr.mxu0 0.0
  %1544 = vmatpush1.msra.mxu0 0.0
  %1545 = vmatprep.subr.mxu0 0.0
  %1546 = vmatpush1.msra.mxu0 0.0
  %1547 = vmatprep.subr.mxu0 0.0
  %1548 = vmatpush1.msra.mxu0 0.0
  %1549 = vmatprep.subr.mxu0 0.0
  %1550 = vmatpush1.msra.mxu0 0.0
  %1551 = vmatprep.subr.mxu0 0.0
  %1552 = vmatpush1.msra.mxu0 0.0
  %1553 = vmatprep.subr.mxu0 0.0
  %1554 = vmatpush1.msra.mxu0 0.0
  %1555 = vmatprep.subr.mxu0 0.0
  %1556 = vmatpush1.msra.mxu0 0.0
  %1557 = vmatprep.subr.mxu0 0.0
  %1558 = vmatpush1.msra.mxu0 0.0
  %1559 = vmatprep.subr.mxu0 0.0
  %1560 = vmatpush1.msra.mxu0 0.0
  %1561 = vmatprep.subr.mxu0 0.0
  %1562 = vmatpush1.msra.mxu0 0.0
  %1563 = vmatprep.subr.mxu0 0.0
  %1564 = vmatpush1.msra.mxu0 0.0
  %1565 = vmatprep.subr.mxu0 0.0
  %1566 = vmatpush1.msra.mxu0 0.0
  %1567 = vmatprep.subr.mxu0 0.0
  %1568 = vmatpush1.msra.mxu0 0.0
  %1569 = vmatprep.subr.mxu0 0.0
  %1570 = vmatpush1.msra.mxu0 0.0
  %1571 = vmatprep.subr.mxu0 0.0
  %1572 = vmatpush1.msra.mxu0 0.0
  %1573 = vmatprep.subr.mxu0 0.0
  %1574 = vmatpush1.msra.mxu0 0.0
  %1575 = vmatprep.subr.mxu0 0.0
  %1576 = vmatpush1.msra.mxu0 0.0
  %1577 = vmatprep.subr.mxu0 0.0
  %1578 = vmatpush1.msra.mxu0 0.0
  %1579 = vmatprep.subr.mxu0 0.0
  %1580 = vmatpush1.msra.mxu0 0.0
  %1581 = vmatprep.subr.mxu0 0.0
  %1582 = vmatpush1.msra.mxu0 0.0
  %1583 = vmatprep.subr.mxu0 0.0
  %1584 = vmatpush1.msra.mxu0 0.0
  %1585 = vmatprep.subr.mxu0 0.0
  %1586 = vmatpush1.msra.mxu0 0.0
  %1587 = vmatprep.mubr.f32.mxu0 0.0
  %1588 = vmatmul.mubr.f32.gmra.mrb[0].mxu0 %v1518
  %v1589 = vpop.f32.mrb[0].mxu0
  %v1590 = vadd.f32 %v1510, %v1589
  %v1591 = vpop.f32.mrb[0].mxu0
  %1592 = vmatprep.mubr.f32.mxu0 0.0
  %1593 = vmatmul.mubr.f32.gmra.mrb[0].mxu0 %v1521
  %v1594 = vpop.f32.mrb[0].mxu0
  %v1595 = vadd.f32 %v1515, %v1594
  %v1596 = vpop.f32.mrb[0].mxu0
  %1597 = vdwg.mxu0
  %v1598 = vmax.f32 %v1590, 0.0
  %v1599 = vmax.f32 %v1595, 0.0
  %1602 = vrot.lane.b32.xlu0 %v1598, 127
  %v1603 = vpop.permute.xlu0 %1602
  %1604 = vrot.lane.b32.xlu0 %v1599, 127
  %v1605 = vpop.permute.xlu0 %1604
  %1608 = vrot.lane.b32.xlu0 %v1598, 71
  %v1609 = vpop.permute.xlu0 %1608
  %1610 = vrot.lane.b32.xlu0 %v1599, 71
  %v1611 = vpop.permute.xlu0 %1610
  %v1614 = vsel %vm1161, %v1603, %v1609
  %v1615 = vsel %vm1161, %v1605, %v1611
  %v1616 = vmax.f32 %v1598, %v1614
  %v1617 = vmax.f32 %v1599, %v1615
  %1620 = vrot.lane.b32.xlu0 %v1616, 122
  %v1621 = vpop.permute.xlu0 %1620
  %1622 = vrot.lane.b32.xlu0 %v1617, 122
  %v1623 = vpop.permute.xlu0 %1622
  %1626 = vrot.lane.b32.xlu0 %v1616, 66
  %v1627 = vpop.permute.xlu0 %1626
  %1628 = vrot.lane.b32.xlu0 %v1617, 66
  %v1629 = vpop.permute.xlu0 %1628
  %v1632 = vsel %vm1497, %v1621, %v1627
  %v1633 = vsel %vm1497, %v1623, %v1629
  %v1634 = vmax.f32 %v1616, %v1632
  %v1635 = vmax.f32 %v1617, %v1633
  %v1636 = vld [vmem:[%s9] sm:$0xff]
  %v1637 = vld [vmem:[%s9 + $0x8] sm:$0xff]
  %v1638 = vld [vmem:[%s9 + $0x10] sm:$0xff]
  %v1639 = vld [vmem:[%s9 + $0x18] sm:$0xff]
  %v1640 = vld [vmem:[%s9 + $0x20] sm:$0xff]
  %v1641 = vld [vmem:[%s9 + $0x28] sm:$0xff]
  %v1642 = vld [vmem:[%s9 + $0x30] sm:$0xff]
  %v1643 = vld [vmem:[%s9 + $0x38] sm:$0xff]
  %v1644 = vld [vmem:[%s9 + $0x40] sm:$0xff]
  %v1646 = vsel %vm1367, %v1634, 0
  %v1649 = vsel %vm1367, %v1635, 0
  %1651 = vmatprep.subr.mxu0 0.0
  %1652 = vmatpush1.msra.mxu0 %v1636
  %1653 = vmatprep.subr.mxu0 0.0
  %1654 = vmatpush1.msra.mxu0 %v1637
  %1655 = vmatprep.subr.mxu0 0.0
  %1656 = vmatpush1.msra.mxu0 %v1638
  %1657 = vmatprep.subr.mxu0 0.0
  %1658 = vmatpush1.msra.mxu0 %v1639
  %1659 = vmatprep.subr.mxu0 0.0
  %1660 = vmatpush1.msra.mxu0 %v1640
  %1661 = vmatprep.subr.mxu0 0.0
  %1662 = vmatpush1.msra.mxu0 %v1641
  %1663 = vmatprep.subr.mxu0 0.0
  %1664 = vmatpush1.msra.mxu0 %v1642
  %1665 = vmatprep.subr.mxu0 0.0
  %1666 = vmatpush1.msra.mxu0 %v1643
  %1667 = vmatprep.subr.mxu0 0.0
  %1668 = vmatpush1.msra.mxu0 %v1644
  %1669 = vmatprep.subr.mxu0 0.0
  %1670 = vmatpush1.msra.mxu0 0.0
  %1671 = vmatprep.subr.mxu0 0.0
  %1672 = vmatpush1.msra.mxu0 0.0
  %1673 = vmatprep.subr.mxu0 0.0
  %1674 = vmatpush1.msra.mxu0 0.0
  %1675 = vmatprep.subr.mxu0 0.0
  %1676 = vmatpush1.msra.mxu0 0.0
  %1677 = vmatprep.subr.mxu0 0.0
  %1678 = vmatpush1.msra.mxu0 0.0
  %1679 = vmatprep.subr.mxu0 0.0
  %1680 = vmatpush1.msra.mxu0 0.0
  %1681 = vmatprep.subr.mxu0 0.0
  %1682 = vmatpush1.msra.mxu0 0.0
  %1683 = vmatprep.subr.mxu0 0.0
  %1684 = vmatpush1.msra.mxu0 0.0
  %1685 = vmatprep.subr.mxu0 0.0
  %1686 = vmatpush1.msra.mxu0 0.0
  %1687 = vmatprep.subr.mxu0 0.0
  %1688 = vmatpush1.msra.mxu0 0.0
  %1689 = vmatprep.subr.mxu0 0.0
  %1690 = vmatpush1.msra.mxu0 0.0
  %1691 = vmatprep.subr.mxu0 0.0
  %1692 = vmatpush1.msra.mxu0 0.0
  %1693 = vmatprep.subr.mxu0 0.0
  %1694 = vmatpush1.msra.mxu0 0.0
  %1695 = vmatprep.subr.mxu0 0.0
  %1696 = vmatpush1.msra.mxu0 0.0
  %1697 = vmatprep.subr.mxu0 0.0
  %1698 = vmatpush1.msra.mxu0 0.0
  %1699 = vmatprep.subr.mxu0 0.0
  %1700 = vmatpush1.msra.mxu0 0.0
  %1701 = vmatprep.subr.mxu0 0.0
  %1702 = vmatpush1.msra.mxu0 0.0
  %1703 = vmatprep.subr.mxu0 0.0
  %1704 = vmatpush1.msra.mxu0 0.0
  %1705 = vmatprep.subr.mxu0 0.0
  %1706 = vmatpush1.msra.mxu0 0.0
  %1707 = vmatprep.subr.mxu0 0.0
  %1708 = vmatpush1.msra.mxu0 0.0
  %1709 = vmatprep.subr.mxu0 0.0
  %1710 = vmatpush1.msra.mxu0 0.0
  %1711 = vmatprep.subr.mxu0 0.0
  %1712 = vmatpush1.msra.mxu0 0.0
  %1713 = vmatprep.subr.mxu0 0.0
  %1714 = vmatpush1.msra.mxu0 0.0
  %1715 = vmatprep.mubr.f32.mxu0 0.0
  %1716 = vmatmul.mubr.f32.gmra.mrb[0].mxu0 %v1646
  %v1717 = vpop.f32.mrb[0].mxu0
  %v1718 = vadd.f32 0.0, %v1717
  %v1719 = vpop.f32.mrb[0].mxu0
  %1720 = vmatprep.mubr.f32.mxu0 0.0
  %1721 = vmatmul.mubr.f32.gmra.mrb[0].mxu0 %v1649
  %v1722 = vpop.f32.mrb[0].mxu0
  %v1723 = vadd.f32 0.0, %v1722
  %v1724 = vpop.f32.mrb[0].mxu0
  %1725 = vdwg.mxu0
  %1728 = vrot.lane.b32.xlu0 %v1718, 126
  %v1729 = vpop.permute.xlu0 %1728
  %1730 = vrot.lane.b32.xlu0 %v1723, 126
  %v1731 = vpop.permute.xlu0 %1730
  %1734 = vrot.lane.b32.xlu0 %v1718, 124
  %v1735 = vpop.permute.xlu0 %1734
  %1736 = vrot.lane.b32.xlu0 %v1723, 124
  %v1737 = vpop.permute.xlu0 %1736
  %1740 = vrot.lane.b32.xlu0 %v1718, 122
  %v1741 = vpop.permute.xlu0 %1740
  %1742 = vrot.lane.b32.xlu0 %v1723, 122
  %v1743 = vpop.permute.xlu0 %1742
  %v1746 = vld [vmem:[%s10] sm:$0xff]
  %v1747 = vld [vmem:[%s10 + $0x8] sm:$0xff]
  %v1748 = vld [vmem:[%s10 + $0x10] sm:$0xff]
  %v1749 = vld [vmem:[%s10 + $0x18] sm:$0xff]
  %v1750 = vld [vmem:[%s11] sm:$0xff]
  %v1751 = vld [vmem:[%s11 + $0x8] sm:$0xff]
  %v1752 = vld [vmem:[%s11 + $0x10] sm:$0xff]
  %v1753 = vld [vmem:[%s11 + $0x18] sm:$0xff]
  %1755 = vset.pattern.permute.xlu0 0
  %1756 = vperm.xlu0 %1755, %v1750
  %v1757 = vpop.permute.xlu0 %1756
  %1760 = vset.pattern.permute.xlu0 0
  %1761 = vperm.xlu0 %1760, %v1751
  %v1762 = vpop.permute.xlu0 %1761
  %1765 = vset.pattern.permute.xlu0 0
  %1766 = vperm.xlu0 %1765, %v1752
  %v1767 = vpop.permute.xlu0 %1766
  %1770 = vset.pattern.permute.xlu0 0
  %1771 = vperm.xlu0 %1770, %v1753
  %v1772 = vpop.permute.xlu0 %1771
  %vm1774 = vcmask 523264
  %v1776 = vsel %vm1774, %v1746, 0
  %v1779 = vsel %vm1774, %v1747, 0
  %v1782 = vsel %vm1774, %v1748, 0
  %v1785 = vsel %vm1774, %v1749, 0
  %1787 = vmatprep.subr.mxu0 0.0
  %1788 = vmatpush1.msra.mxu0 %v1718
  %1789 = vmatprep.subr.mxu0 0.0
  %1790 = vmatpush1.msra.mxu0 %v1723
  %1791 = vmatprep.subr.mxu0 0.0
  %1792 = vmatpush1.msra.mxu0 %v1729
  %1793 = vmatprep.subr.mxu0 0.0
  %1794 = vmatpush1.msra.mxu0 %v1731
  %1795 = vmatprep.subr.mxu0 0.0
  %1796 = vmatpush1.msra.mxu0 %v1735
  %1797 = vmatprep.subr.mxu0 0.0
  %1798 = vmatpush1.msra.mxu0 %v1737
  %1799 = vmatprep.subr.mxu0 0.0
  %1800 = vmatpush1.msra.mxu0 %v1741
  %1801 = vmatprep.subr.mxu0 0.0
  %1802 = vmatpush1.msra.mxu0 %v1743
  %1803 = vmatprep.subr.mxu0 0.0
  %1804 = vmatpush1.msra.mxu0 0.0
  %1805 = vmatprep.subr.mxu0 0.0
  %1806 = vmatpush1.msra.mxu0 0.0
  %1807 = vmatprep.subr.mxu0 0.0
  %1808 = vmatpush1.msra.mxu0 0.0
  %1809 = vmatprep.subr.mxu0 0.0
  %1810 = vmatpush1.msra.mxu0 0.0
  %1811 = vmatprep.subr.mxu0 0.0
  %1812 = vmatpush1.msra.mxu0 0.0
  %1813 = vmatprep.subr.mxu0 0.0
  %1814 = vmatpush1.msra.mxu0 0.0
  %1815 = vmatprep.subr.mxu0 0.0
  %1816 = vmatpush1.msra.mxu0 0.0
  %1817 = vmatprep.subr.mxu0 0.0
  %1818 = vmatpush1.msra.mxu0 0.0
  %1819 = vmatprep.subr.mxu0 0.0
  %1820 = vmatpush1.msra.mxu0 0.0
  %1821 = vmatprep.subr.mxu0 0.0
  %1822 = vmatpush1.msra.mxu0 0.0
  %1823 = vmatprep.subr.mxu0 0.0
  %1824 = vmatpush1.msra.mxu0 0.0
  %1825 = vmatprep.subr.mxu0 0.0
  %1826 = vmatpush1.msra.mxu0 0.0
  %1827 = vmatprep.subr.mxu0 0.0
  %1828 = vmatpush1.msra.mxu0 0.0
  %1829 = vmatprep.subr.mxu0 0.0
  %1830 = vmatpush1.msra.mxu0 0.0
  %1831 = vmatprep.subr.mxu0 0.0
  %1832 = vmatpush1.msra.mxu0 0.0
  %1833 = vmatprep.subr.mxu0 0.0
  %1834 = vmatpush1.msra.mxu0 0.0
  %1835 = vmatprep.subr.mxu0 0.0
  %1836 = vmatpush1.msra.mxu0 0.0
  %1837 = vmatprep.subr.mxu0 0.0
  %1838 = vmatpush1.msra.mxu0 0.0
  %1839 = vmatprep.subr.mxu0 0.0
  %1840 = vmatpush1.msra.mxu0 0.0
  %1841 = vmatprep.subr.mxu0 0.0
  %1842 = vmatpush1.msra.mxu0 0.0
  %1843 = vmatprep.subr.mxu0 0.0
  %1844 = vmatpush1.msra.mxu0 0.0
  %1845 = vmatprep.subr.mxu0 0.0
  %1846 = vmatpush1.msra.mxu0 0.0
  %1847 = vmatprep.subr.mxu0 0.0
  %1848 = vmatpush1.msra.mxu0 0.0
  %1849 = vmatprep.subr.mxu0 0.0
  %1850 = vmatpush1.msra.mxu0 0.0
  %1851 = vmatprep.mubr.f32.mxu0 0.0
  %1852 = vmatmul.mubr.f32.gmra.mrb[0].mxu0 %v1776
  %v1853 = vpop.f32.mrb[0].mxu0
  %v1854 = vadd.f32 %v1757, %v1853
  %v1855 = vpop.f32.mrb[0].mxu0
  %1856 = vmatprep.mubr.f32.mxu0 0.0
  %1857 = vmatmul.mubr.f32.gmra.mrb[0].mxu0 %v1779
  %v1858 = vpop.f32.mrb[0].mxu0
  %v1859 = vadd.f32 %v1762, %v1858
  %v1860 = vpop.f32.mrb[0].mxu0
  %1861 = vmatprep.mubr.f32.mxu0 0.0
  %1862 = vmatmul.mubr.f32.gmra.mrb[0].mxu0 %v1782
  %v1863 = vpop.f32.mrb[0].mxu0
  %v1864 = vadd.f32 %v1767, %v1863
  %v1865 = vpop.f32.mrb[0].mxu0
  %1866 = vmatprep.mubr.f32.mxu0 0.0
  %1867 = vmatmul.mubr.f32.gmra.mrb[0].mxu0 %v1785
  %v1868 = vpop.f32.mrb[0].mxu0
  %v1869 = vadd.f32 %v1772, %v1868
  %v1870 = vpop.f32.mrb[0].mxu0
  %1871 = vdwg.mxu0
  %v1872 = vmax.f32 %v1854, 0.0
  %v1873 = vmax.f32 %v1859, 0.0
  %v1874 = vmax.f32 %v1864, 0.0
  %v1875 = vmax.f32 %v1869, 0.0
  %v1876 = vld [vmem:[%s12] sm:$0xff]
  %v1877 = vld [vmem:[%s12 + $0x8] sm:$0xff]
  %v1878 = vld [vmem:[%s13] sm:$0xff]
  %v1879 = vld [vmem:[%s13 + $0x8] sm:$0xff]
  %1881 = vset.pattern.permute.xlu0 0
  %1882 = vperm.xlu0 %1881, %v1878
  %v1883 = vpop.permute.xlu0 %1882
  %1886 = vset.pattern.permute.xlu0 0
  %1887 = vperm.xlu0 %1886, %v1879
  %v1888 = vpop.permute.xlu0 %1887
  %vm1890 = vcmask 261120
  %v1892 = vsel %vm1890, %v1876, 0
  %v1895 = vsel %vm1890, %v1877, 0
  %1897 = vmatprep.subr.mxu0 0.0
  %1898 = vmatpush1.msra.mxu0 %v1872
  %1899 = vmatprep.subr.mxu0 0.0
  %1900 = vmatpush1.msra.mxu0 %v1873
  %1901 = vmatprep.subr.mxu0 0.0
  %1902 = vmatpush1.msra.mxu0 %v1874
  %1903 = vmatprep.subr.mxu0 0.0
  %1904 = vmatpush1.msra.mxu0 %v1875
  %1905 = vmatprep.subr.mxu0 0.0
  %1906 = vmatpush1.msra.mxu0 0.0
  %1907 = vmatprep.subr.mxu0 0.0
  %1908 = vmatpush1.msra.mxu0 0.0
  %1909 = vmatprep.subr.mxu0 0.0
  %1910 = vmatpush1.msra.mxu0 0.0
  %1911 = vmatprep.subr.mxu0 0.0
  %1912 = vmatpush1.msra.mxu0 0.0
  %1913 = vmatprep.subr.mxu0 0.0
  %1914 = vmatpush1.msra.mxu0 0.0
  %1915 = vmatprep.subr.mxu0 0.0
  %1916 = vmatpush1.msra.mxu0 0.0
  %1917 = vmatprep.subr.mxu0 0.0
  %1918 = vmatpush1.msra.mxu0 0.0
  %1919 = vmatprep.subr.mxu0 0.0
  %1920 = vmatpush1.msra.mxu0 0.0
  %1921 = vmatprep.subr.mxu0 0.0
  %1922 = vmatpush1.msra.mxu0 0.0
  %1923 = vmatprep.subr.mxu0 0.0
  %1924 = vmatpush1.msra.mxu0 0.0
  %1925 = vmatprep.subr.mxu0 0.0
  %1926 = vmatpush1.msra.mxu0 0.0
  %1927 = vmatprep.subr.mxu0 0.0
  %1928 = vmatpush1.msra.mxu0 0.0
  %1929 = vmatprep.subr.mxu0 0.0
  %1930 = vmatpush1.msra.mxu0 0.0
  %1931 = vmatprep.subr.mxu0 0.0
  %1932 = vmatpush1.msra.mxu0 0.0
  %1933 = vmatprep.subr.mxu0 0.0
  %1934 = vmatpush1.msra.mxu0 0.0
  %1935 = vmatprep.subr.mxu0 0.0
  %1936 = vmatpush1.msra.mxu0 0.0
  %1937 = vmatprep.subr.mxu0 0.0
  %1938 = vmatpush1.msra.mxu0 0.0
  %1939 = vmatprep.subr.mxu0 0.0
  %1940 = vmatpush1.msra.mxu0 0.0
  %1941 = vmatprep.subr.mxu0 0.0
  %1942 = vmatpush1.msra.mxu0 0.0
  %1943 = vmatprep.subr.mxu0 0.0
  %1944 = vmatpush1.msra.mxu0 0.0
  %1945 = vmatprep.subr.mxu0 0.0
  %1946 = vmatpush1.msra.mxu0 0.0
  %1947 = vmatprep.subr.mxu0 0.0
  %1948 = vmatpush1.msra.mxu0 0.0
  %1949 = vmatprep.subr.mxu0 0.0
  %1950 = vmatpush1.msra.mxu0 0.0
  %1951 = vmatprep.subr.mxu0 0.0
  %1952 = vmatpush1.msra.mxu0 0.0
  %1953 = vmatprep.subr.mxu0 0.0
  %1954 = vmatpush1.msra.mxu0 0.0
  %1955 = vmatprep.subr.mxu0 0.0
  %1956 = vmatpush1.msra.mxu0 0.0
  %1957 = vmatprep.subr.mxu0 0.0
  %1958 = vmatpush1.msra.mxu0 0.0
  %1959 = vmatprep.subr.mxu0 0.0
  %1960 = vmatpush1.msra.mxu0 0.0
  %1961 = vmatprep.mubr.f32.mxu0 0.0
  %1962 = vmatmul.mubr.f32.gmra.mrb[0].mxu0 %v1892
  %v1963 = vpop.f32.mrb[0].mxu0
  %v1964 = vadd.f32 %v1883, %v1963
  %v1965 = vpop.f32.mrb[0].mxu0
  %1966 = vmatprep.mubr.f32.mxu0 0.0
  %1967 = vmatmul.mubr.f32.gmra.mrb[0].mxu0 %v1895
  %v1968 = vpop.f32.mrb[0].mxu0
  %v1969 = vadd.f32 %v1888, %v1968
  %v1970 = vpop.f32.mrb[0].mxu0
  %1971 = vdwg.mxu0
  %v1972 = vmax.f32 %v1964, 0.0
  %v1973 = vmax.f32 %v1969, 0.0
  %v1974 = vld [vmem:[%s14] sm:$0xff]
  %v1975 = vld [vmem:[%s14 + $0x8] sm:$0x3]
  %v1976 = vld [vmem:[%s15] sm:$0xff]
  %v1977 = vld [vmem:[%s15 + $0x8] sm:$0x3]
  %1979 = vset.pattern.permute.xlu0 0
  %1980 = vperm.xlu0 %1979, %v1976
  %v1981 = vpop.permute.xlu0 %1980
  %1984 = vset.pattern.permute.xlu0 0
  %1985 = vperm.xlu0 %1984, %v1977
  %v1986 = vpop.permute.xlu0 %1985
  %vm1988 = vcmask 130048
  %v1990 = vsel %vm1988, %v1974, 0
  %v1993 = vsel %vm1988, %v1975, 0
  %1995 = vmatprep.subr.mxu0 0.0
  %1996 = vmatpush1.msra.mxu0 %v1972
  %1997 = vmatprep.subr.mxu0 0.0
  %1998 = vmatpush1.msra.mxu0 %v1973
  %1999 = vmatprep.subr.mxu0 0.0
  %2000 = vmatpush1.msra.mxu0 0.0
  %2001 = vmatprep.subr.mxu0 0.0
  %2002 = vmatpush1.msra.mxu0 0.0
  %2003 = vmatprep.subr.mxu0 0.0
  %2004 = vmatpush1.msra.mxu0 0.0
  %2005 = vmatprep.subr.mxu0 0.0
  %2006 = vmatpush1.msra.mxu0 0.0
  %2007 = vmatprep.subr.mxu0 0.0
  %2008 = vmatpush1.msra.mxu0 0.0
  %2009 = vmatprep.subr.mxu0 0.0
  %2010 = vmatpush1.msra.mxu0 0.0
  %2011 = vmatprep.subr.mxu0 0.0
  %2012 = vmatpush1.msra.mxu0 0.0
  %2013 = vmatprep.subr.mxu0 0.0
  %2014 = vmatpush1.msra.mxu0 0.0
  %2015 = vmatprep.subr.mxu0 0.0
  %2016 = vmatpush1.msra.mxu0 0.0
  %2017 = vmatprep.subr.mxu0 0.0
  %2018 = vmatpush1.msra.mxu0 0.0
  %2019 = vmatprep.subr.mxu0 0.0
  %2020 = vmatpush1.msra.mxu0 0.0
  %2021 = vmatprep.subr.mxu0 0.0
  %2022 = vmatpush1.msra.mxu0 0.0
  %2023 = vmatprep.subr.mxu0 0.0
  %2024 = vmatpush1.msra.mxu0 0.0
  %2025 = vmatprep.subr.mxu0 0.0
  %2026 = vmatpush1.msra.mxu0 0.0
  %2027 = vmatprep.subr.mxu0 0.0
  %2028 = vmatpush1.msra.mxu0 0.0
  %2029 = vmatprep.subr.mxu0 0.0
  %2030 = vmatpush1.msra.mxu0 0.0
  %2031 = vmatprep.subr.mxu0 0.0
  %2032 = vmatpush1.msra.mxu0 0.0
  %2033 = vmatprep.subr.mxu0 0.0
  %2034 = vmatpush1.msra.mxu0 0.0
  %2035 = vmatprep.subr.mxu0 0.0
  %2036 = vmatpush1.msra.mxu0 0.0
  %2037 = vmatprep.subr.mxu0 0.0
  %2038 = vmatpush1.msra.mxu0 0.0
  %2039 = vmatprep.subr.mxu0 0.0
  %2040 = vmatpush1.msra.mxu0 0.0
  %2041 = vmatprep.subr.mxu0 0.0
  %2042 = vmatpush1.msra.mxu0 0.0
  %2043 = vmatprep.subr.mxu0 0.0
  %2044 = vmatpush1.msra.mxu0 0.0
  %2045 = vmatprep.subr.mxu0 0.0
  %2046 = vmatpush1.msra.mxu0 0.0
  %2047 = vmatprep.subr.mxu0 0.0
  %2048 = vmatpush1.msra.mxu0 0.0
  %2049 = vmatprep.subr.mxu0 0.0
  %2050 = vmatpush1.msra.mxu0 0.0
  %2051 = vmatprep.subr.mxu0 0.0
  %2052 = vmatpush1.msra.mxu0 0.0
  %2053 = vmatprep.subr.mxu0 0.0
  %2054 = vmatpush1.msra.mxu0 0.0
  %2055 = vmatprep.subr.mxu0 0.0
  %2056 = vmatpush1.msra.mxu0 0.0
  %2057 = vmatprep.subr.mxu0 0.0
  %2058 = vmatpush1.msra.mxu0 0.0
  %2059 = vmatprep.mubr.f32.mxu0 0.0
  %2060 = vmatmul.mubr.f32.gmra.mrb[0].mxu0 %v1990
  %v2061 = vpop.f32.mrb[0].mxu0
  %v2062 = vadd.f32 %v1981, %v2061
  %v2063 = vpop.f32.mrb[0].mxu0
  %2064 = vmatprep.mubr.f32.mxu0 0.0
  %2065 = vmatmul.mubr.f32.gmra.mrb[0].mxu0 %v1993
  %v2066 = vpop.f32.mrb[0].mxu0
  %v2067 = vadd.f32 %v1986, %v2066
  %v2068 = vpop.f32.mrb[0].mxu0
  %2069 = vdwg.mxu0
  %vm2070 = vcmask 15360
  %2071 = vst.msk [vmem:[%s16] sm:$0xff] %vm2070, %v2062
  %vm2072 = vcmask 9216
  %2073 = vst.msk [vmem:[%s16 + $0x8] sm:$0x3] %vm2072, %v2067
  // Predicated region
  $region66: #{convnet_forward.1} parent=0 // pred_check
    _
  $region67: #{convnet_forward.1} parent=0 // pred_check_branch
    %2075 = sbr.rel (0) target = $region69
  $region68: #{convnet_forward.1} parent=0 // pred_region
    _
  $region69: #{convnet_forward.1} parent=0 // pred_fallthru
    _
  // Predicated region
  $region70: #{convnet_forward.1} parent=0 // pred_check
    _
  $region71: #{convnet_forward.1} parent=0 // pred_check_branch
    %2077 = sbr.rel (0) target = $region73
  $region72: #{convnet_forward.1} parent=0 // pred_region
    _
  $region73: #{convnet_forward.1} parent=0 // pred_fallthru
    _

</llo_original>
